<compile_context>
chip_gen: v5e
topology: v5e:2x2
jax: 0.10.0
libtpu: 0.0.40
codegen_flags: <defaults>
</compile_context>

<pallas_src>
import jax
import jax.numpy as jnp
from jax.experimental import pallas as pl
from jax.experimental.pallas import tpu as pltpu


_N_CHUNK = 1024  # lane-chunk width for the 4096-wide layers


def _swish(y):
    # swish(y) = y * sigmoid(y); exp and the approximate reciprocal both run on
    # the EUP slot, keeping the VPU free (and everything hides under weight DMA).
    return y * pl.reciprocal(1.0 + jnp.exp(-y), approx=True)


def _fused_mlp_kernel(x_ref,
                      w1_ref, b1_ref, w2_ref, b2_ref,
                      w3_ref, b3_ref, w4_ref, b4_ref,
                      w5_ref, b5_ref, w6_ref, b6_ref,
                      o_ref,
                      acc_ref, h2_ref):
    """Grid = (stage, chunk).

    stage 0: per 1024-col chunk of tc1 -> relu -> immediately multiply by the
             matching (1024,128) slab of w2, accumulate into acc_ref.
             On the last chunk, h2 = swish(acc + b2) is stored to h2_ref.
    stage 1: same structure for tc3 (swish) + tc4 slabs; on the last chunk the
             tiny tc5/tc6 layers are applied and the logits written.
    """
    f32 = jnp.float32
    s = pl.program_id(0)
    c = pl.program_id(1)
    last_c = pl.num_programs(1) - 1

    @pl.when(c == 0)
    def _():  # fresh accumulator at the start of each stage
        acc_ref[...] = jnp.zeros_like(acc_ref)

    # ---- stage 0: tc1 chunk (+relu, dropout1=id) fused with tc2 K-slab ----
    @pl.when(s == 0)
    def _():
        y = jnp.dot(x_ref[...].astype(w1_ref.dtype), w1_ref[...],
                    preferred_element_type=f32) + b1_ref[...]
        y = jnp.maximum(y, 0.0)
        acc_ref[...] += jnp.dot(y.astype(w2_ref.dtype), w2_ref[...],
                                preferred_element_type=f32)

    @pl.when(jnp.logical_and(s == 0, c == last_c))
    def _():  # tc2 bias + swish (dropout2 = id)
        h2_ref[...] = _swish(acc_ref[...] + b2_ref[...])

    # ---- stage 1: tc3 chunk (+swish, dropout3=id) fused with tc4 K-slab ----
    @pl.when(s == 1)
    def _():
        y = jnp.dot(h2_ref[...].astype(w3_ref.dtype), w3_ref[...],
                    preferred_element_type=f32) + b3_ref[...]
        y = _swish(y)
        acc_ref[...] += jnp.dot(y.astype(w4_ref.dtype), w4_ref[...],
                                preferred_element_type=f32)

    @pl.when(jnp.logical_and(s == 1, c == last_c))
    def _():  # tc4 + swish, tc5 + swish, tc6 (logits)
        h4 = _swish(acc_ref[...] + b4_ref[...])
        h5 = _swish(jnp.dot(h4.astype(w5_ref.dtype), w5_ref[...],
                            preferred_element_type=f32) + b5_ref[...])
        o_ref[...] = (jnp.dot(h5.astype(w6_ref.dtype), w6_ref[...],
                              preferred_element_type=f32)
                      + b6_ref[...]).astype(o_ref.dtype)


def network_forward(params, x):
    """Forward pass of Network (dropout = identity, eval() semantics).

    `params` must be the prepared form produced by `init_params`:
    weights already in their storage dtype, biases as (1, n) float32.
    """
    x = x.astype(jnp.float32)
    m, k1 = x.shape
    mp = ((m + 7) // 8) * 8              # pad batch to a sublane multiple
    if mp != m:
        x = jnp.pad(x, ((0, mp - m), (0, 0)))

    (w1, b1), (w2, b2), (w3, b3), (w4, b4), (w5, b5), (w6, b6) = params
    n_hidden = w1.shape[1]               # 4096
    d2 = w2.shape[1]                     # 128
    d4 = w4.shape[1]                     # 128
    d5 = w5.shape[1]                     # 128
    n_out = w6.shape[1]                  # 2
    assert w3.shape[1] == n_hidden and d2 == d4, "unexpected layer widths"

    nc = min(_N_CHUNK, n_hidden)
    assert n_hidden % nc == 0
    n_chunks = n_hidden // nc
    last = n_chunks - 1

    # Streamed-weight index maps.  Stage selection is pure integer arithmetic
    # on the grid indices; indices are pinned across the stage transition so
    # no chunk is ever DMA'd twice.
    w1_map = lambda s, c: (0, c * (1 - s) + last * s)
    b1_map = lambda s, c: (0, c * (1 - s) + last * s)
    w2_map = lambda s, c: (c * (1 - s) + last * s, 0)
    w3_map = lambda s, c: (0, c * s)
    b3_map = lambda s, c: (0, c * s)
    w4_map = lambda s, c: (c * s, 0)
    const2 = lambda s, c: (0, 0)

    in_specs = [
        pl.BlockSpec((mp, k1), const2),          # x            (resident)
        pl.BlockSpec((k1, nc), w1_map),          # w1 chunk     (streamed)
        pl.BlockSpec((1, nc), b1_map),           # b1 chunk
        pl.BlockSpec((nc, d2), w2_map),          # w2 K-slab    (streamed)
        pl.BlockSpec((1, d2), const2),           # b2
        pl.BlockSpec((d2, nc), w3_map),          # w3 chunk     (streamed)
        pl.BlockSpec((1, nc), b3_map),           # b3 chunk
        pl.BlockSpec((nc, d4), w4_map),          # w4 K-slab    (streamed)
        pl.BlockSpec((1, d4), const2),           # b4
        pl.BlockSpec((d4, d5), const2),          # w5           (resident)
        pl.BlockSpec((1, d5), const2),           # b5
        pl.BlockSpec((d5, n_out), const2),       # w6           (resident)
        pl.BlockSpec((1, n_out), const2),        # b6
    ]
    args = (x, w1, b1, w2, b2, w3, b3, w4, b4, w5, b5, w6, b6)

    # Scheduling hint: the kernel is weight-bandwidth bound (~4.3 MB streamed
    # vs ~34 MFLOP at batch 8).
    flops = 2 * mp * (k1 * n_hidden + n_hidden * d2 + d2 * n_hidden
                      + n_hidden * d4 + d4 * d5 + d5 * n_out)
    transcendentals = mp * (d2 + n_hidden + d4 + d5)
    bytes_accessed = (sum(int(a.size) * a.dtype.itemsize for a in args)
                      + mp * n_out * 4)
    cost = pl.CostEstimate(flops=flops, transcendentals=transcendentals,
                           bytes_accessed=bytes_accessed)

    out = pl.pallas_call(
        _fused_mlp_kernel,
        out_shape=jax.ShapeDtypeStruct((mp, n_out), jnp.float32),
        grid_spec=pltpu.PrefetchScalarGridSpec(
            num_scalar_prefetch=0,
            grid=(2, n_chunks),                   # (stage, chunk)
            in_specs=in_specs,
            out_specs=pl.BlockSpec((mp, n_out), const2),
            scratch_shapes=[
                pltpu.VMEM((mp, d2), jnp.float32),   # acc for tc2 / tc4
                pltpu.VMEM((mp, d2), jnp.float32),   # h2 (tc2 output)
            ],
        ),
        # Both axes carry sequential dependencies (chunk reduction; stage 1
        # consumes stage 0's h2), so they must stay "arbitrary".
        compiler_params=pltpu.CompilerParams(
            dimension_semantics=("arbitrary", "arbitrary"),
        ),
        cost_estimate=cost,
    )(*args)
    return out[:m]


# Weight storage dtypes: the four big layers in bf16 (halves HBM bytes of a
# weight-bandwidth-bound kernel); the tiny tc5/tc6 stay f32.
_W_DTYPES = (jnp.bfloat16, jnp.bfloat16, jnp.bfloat16, jnp.bfloat16,
             jnp.float32, jnp.float32)


def init_params(key, input_size):
    """Deterministic init of the 6 Linear layers, already in kernel-ready form:
    weights in their storage dtype, biases as (1, n) float32 (one-time prep,
    hoisted out of the per-call path)."""
    dims = [(input_size, 4096), (4096, 128), (128, 4096),
            (4096, 128), (128, 128), (128, 2)]
    params = []
    for (fan_in, fan_out), wdt in zip(dims, _W_DTYPES):
        kw, kb, key = jax.random.split(key, 3)
        bound = 1.0 / (fan_in ** 0.5)
        w = jax.random.uniform(kw, (fan_in, fan_out), jnp.float32, -bound, bound)
        b = jax.random.uniform(kb, (fan_out,), jnp.float32, -bound, bound)
        params.append((w.astype(wdt), b.reshape(1, fan_out)))
    return params


def reference_forward(params, x):
    x = x.astype(jnp.float32)
    acts = ["relu", "swish", "swish", "swish", "swish", "none"]
    for (w, b), a in zip(params, acts):
        x = x @ w.astype(jnp.float32) + b
        if a == "relu":
            x = jnp.maximum(x, 0.0)
        elif a == "swish":
            x = x * jax.nn.sigmoid(x)
    return x


if __name__ == "__main__":
    key = jax.random.PRNGKey(0)
    kx, kp = jax.random.split(key)

    batch, input_size = 2, 128
    x = jax.random.normal(kx, (batch, input_size), jnp.float32)
    params = init_params(kp, input_size)

    fwd = jax.jit(network_forward)
    out = jax.block_until_ready(fwd(params, x))
    ref = reference_forward(params, x)

    assert out.shape == (batch, 2), out.shape
    # bf16 weight storage + bf16 MXU inputs on the big layers -> relaxed tolerance.
    assert jnp.allclose(out, ref, atol=2e-2, rtol=2e-2), "mismatch vs reference"
    print("KERNEL_OK")
</pallas_src>

<mosaic_0001>
module attributes {stable_mosaic.version = 11 : i64} {
  func.func @_fused_mlp_kernel(%arg0: i32, %arg1: i32, %arg2: memref<8x128xf32, #tpu.memory_space<vmem>>, %arg3: memref<128x1024xbf16, #tpu.memory_space<vmem>>, %arg4: memref<1x1024xf32, #tpu.memory_space<vmem>>, %arg5: memref<1024x128xbf16, #tpu.memory_space<vmem>>, %arg6: memref<1x128xf32, #tpu.memory_space<vmem>>, %arg7: memref<128x1024xbf16, #tpu.memory_space<vmem>>, %arg8: memref<1x1024xf32, #tpu.memory_space<vmem>>, %arg9: memref<1024x128xbf16, #tpu.memory_space<vmem>>, %arg10: memref<1x128xf32, #tpu.memory_space<vmem>>, %arg11: memref<128x128xf32, #tpu.memory_space<vmem>>, %arg12: memref<1x128xf32, #tpu.memory_space<vmem>>, %arg13: memref<128x2xf32, #tpu.memory_space<vmem>>, %arg14: memref<1x2xf32, #tpu.memory_space<vmem>>, %arg15: memref<8x2xf32, #tpu.memory_space<vmem>>, %arg16: memref<8x128xf32, #tpu.memory_space<vmem>>, %arg17: memref<8x128xf32, #tpu.memory_space<vmem>>) attributes {dimension_semantics = [#tpu.dimension_semantics<arbitrary>, #tpu.dimension_semantics<arbitrary>], iteration_bounds = array<i64: 2, 4>, scalar_prefetch = 0 : i64, scratch_operands = 2 : i64, tpu.core_type = #tpu.core_type<tc>, window_params = [{pipeline_mode = #tpu.pipeline_mode<synchronous>, transform_indices = @transform_0, window_bounds = array<i64: 8, 128>}, {transform_indices = @transform_1, window_bounds = array<i64: 128, 1024>}, {transform_indices = @transform_2, window_bounds = array<i64: 1, 1024>}, {transform_indices = @transform_3, window_bounds = array<i64: 1024, 128>}, {pipeline_mode = #tpu.pipeline_mode<synchronous>, transform_indices = @transform_4, window_bounds = array<i64: 1, 128>}, {transform_indices = @transform_5, window_bounds = array<i64: 128, 1024>}, {transform_indices = @transform_6, window_bounds = array<i64: 1, 1024>}, {transform_indices = @transform_7, window_bounds = array<i64: 1024, 128>}, {pipeline_mode = #tpu.pipeline_mode<synchronous>, transform_indices = @transform_8, window_bounds = array<i64: 1, 128>}, {pipeline_mode = #tpu.pipeline_mode<synchronous>, transform_indices = @transform_9, window_bounds = array<i64: 128, 128>}, {pipeline_mode = #tpu.pipeline_mode<synchronous>, transform_indices = @transform_10, window_bounds = array<i64: 1, 128>}, {pipeline_mode = #tpu.pipeline_mode<synchronous>, transform_indices = @transform_11, window_bounds = array<i64: 128, 2>}, {pipeline_mode = #tpu.pipeline_mode<synchronous>, transform_indices = @transform_12, window_bounds = array<i64: 1, 2>}, {pipeline_mode = #tpu.pipeline_mode<synchronous>, transform_indices = @transform_13, window_bounds = array<i64: 8, 2>}]} {
    %c0_i32 = arith.constant 0 : i32
    %0 = arith.cmpi eq, %arg1, %c0_i32 : i32
    %1 = arith.extui %0 : i1 to i32
    %c0_i32_0 = arith.constant 0 : i32
    %2 = arith.cmpi ne, %1, %c0_i32_0 : i32
    scf.if %2 {
      %cst = arith.constant 0.000000e+00 : f32
      %19 = vector.broadcast %cst : f32 to vector<8x128xf32>
      %c0 = arith.constant 0 : index
      %c0_9 = arith.constant 0 : index
      %20 = vector.load %arg16[%c0, %c0_9] : memref<8x128xf32, #tpu.memory_space<vmem>>, vector<8x128xf32>
      tpu.vector_store %arg16[%c0, %c0_9], %19 {strides = array<i32>} : memref<8x128xf32, #tpu.memory_space<vmem>>, vector<8x128xf32>,
    } else {
    }
    %c0_i32_1 = arith.constant 0 : i32
    %3 = arith.cmpi eq, %arg0, %c0_i32_1 : i32
    %4 = arith.extui %3 : i1 to i32
    %c0_i32_2 = arith.constant 0 : i32
    %5 = arith.cmpi ne, %4, %c0_i32_2 : i32
    scf.if %5 {
      %c0 = arith.constant 0 : index
      %c0_9 = arith.constant 0 : index
      %19 = vector.load %arg2[%c0, %c0_9] : memref<8x128xf32, #tpu.memory_space<vmem>>, vector<8x128xf32>
      %20 = arith.truncf %19 : vector<8x128xf32> to vector<8x128xbf16>
      %c0_10 = arith.constant 0 : index
      %c0_11 = arith.constant 0 : index
      %21 = vector.load %arg3[%c0_10, %c0_11] : memref<128x1024xbf16, #tpu.memory_space<vmem>>, vector<128x1024xbf16>
      %cst = arith.constant dense<0.000000e+00> : vector<8x1024xf32>
      %22 = tpu.matmul %20, %21, %cst {dimension_numbers = #tpu.dot_dimension_numbers<[1], [0], [0], [1], [0, 0, 1, 1], [], []>} : vector<8x128xbf16>, vector<128x1024xbf16>, vector<8x1024xf32> -> vector<8x1024xf32>
      %c0_12 = arith.constant 0 : index
      %c0_13 = arith.constant 0 : index
      %23 = vector.load %arg4[%c0_12, %c0_13] : memref<1x1024xf32, #tpu.memory_space<vmem>>, vector<1x1024xf32>
      %24 = vector.broadcast %23 : vector<1x1024xf32> to vector<8x1024xf32>
      %25 = arith.addf %22, %24 : vector<8x1024xf32>
      %cst_14 = arith.constant 0.000000e+00 : f32
      %26 = vector.broadcast %cst_14 : f32 to vector<8x1024xf32>
      %27 = arith.maximumf %25, %26 : vector<8x1024xf32>
      %c0_15 = arith.constant 0 : index
      %c0_16 = arith.constant 0 : index
      %28 = vector.load %arg16[%c0_15, %c0_16] : memref<8x128xf32, #tpu.memory_space<vmem>>, vector<8x128xf32>
      %29 = arith.truncf %27 : vector<8x1024xf32> to vector<8x1024xbf16>
      %c0_17 = arith.constant 0 : index
      %c0_18 = arith.constant 0 : index
      %30 = vector.load %arg5[%c0_17, %c0_18] : memref<1024x128xbf16, #tpu.memory_space<vmem>>, vector<1024x128xbf16>
      %cst_19 = arith.constant dense<0.000000e+00> : vector<8x128xf32>
      %31 = tpu.matmul %29, %30, %cst_19 {dimension_numbers = #tpu.dot_dimension_numbers<[1], [0], [0], [1], [0, 0, 1, 1], [], []>} : vector<8x1024xbf16>, vector<1024x128xbf16>, vector<8x128xf32> -> vector<8x128xf32>
      %32 = arith.addf %28, %31 : vector<8x128xf32>
      %c0_20 = arith.constant 0 : index
      %c0_21 = arith.constant 0 : index
      %33 = vector.load %arg16[%c0_20, %c0_21] : memref<8x128xf32, #tpu.memory_space<vmem>>, vector<8x128xf32>
      tpu.vector_store %arg16[%c0_20, %c0_21], %32 {strides = array<i32>} : memref<8x128xf32, #tpu.memory_space<vmem>>, vector<8x128xf32>,
    } else {
    }
    %c0_i32_3 = arith.constant 0 : i32
    %6 = arith.cmpi eq, %arg0, %c0_i32_3 : i32
    %c3_i32 = arith.constant 3 : i32
    %7 = arith.cmpi eq, %arg1, %c3_i32 : i32
    %8 = arith.andi %6, %7 : i1
    %9 = arith.extui %8 : i1 to i32
    %c0_i32_4 = arith.constant 0 : i32
    %10 = arith.cmpi ne, %9, %c0_i32_4 : i32
    scf.if %10 {
      %c0 = arith.constant 0 : index
      %c0_9 = arith.constant 0 : index
      %19 = vector.load %arg16[%c0, %c0_9] : memref<8x128xf32, #tpu.memory_space<vmem>>, vector<8x128xf32>
      %c0_10 = arith.constant 0 : index
      %c0_11 = arith.constant 0 : index
      %20 = vector.load %arg6[%c0_10, %c0_11] : memref<1x128xf32, #tpu.memory_space<vmem>>, vector<1x128xf32>
      %21 = vector.broadcast %20 : vector<1x128xf32> to vector<8x128xf32>
      %22 = arith.addf %19, %21 : vector<8x128xf32>
      %cst = arith.constant 0.000000e+00 : f32
      %23 = vector.broadcast %cst : f32 to vector<8x128xf32>
      %24 = arith.subf %23, %22 : vector<8x128xf32>
      %25 = math.exp %24 : vector<8x128xf32>
      %cst_12 = arith.constant 1.000000e+00 : f32
      %26 = vector.broadcast %cst_12 : f32 to vector<8x128xf32>
      %27 = arith.addf %26, %25 : vector<8x128xf32>
      %28 = tpu.reciprocal %27 {approx = true} : vector<8x128xf32> -> vector<8x128xf32>
      %29 = arith.mulf %22, %28 : vector<8x128xf32>
      %c0_13 = arith.constant 0 : index
      %c0_14 = arith.constant 0 : index
      %30 = vector.load %arg17[%c0_13, %c0_14] : memref<8x128xf32, #tpu.memory_space<vmem>>, vector<8x128xf32>
      tpu.vector_store %arg17[%c0_13, %c0_14], %29 {strides = array<i32>} : memref<8x128xf32, #tpu.memory_space<vmem>>, vector<8x128xf32>,
    } else {
    }
    %c1_i32 = arith.constant 1 : i32
    %11 = arith.cmpi eq, %arg0, %c1_i32 : i32
    %12 = arith.extui %11 : i1 to i32
    %c0_i32_5 = arith.constant 0 : i32
    %13 = arith.cmpi ne, %12, %c0_i32_5 : i32
    scf.if %13 {
      %c0 = arith.constant 0 : index
      %c0_9 = arith.constant 0 : index
      %19 = vector.load %arg17[%c0, %c0_9] : memref<8x128xf32, #tpu.memory_space<vmem>>, vector<8x128xf32>
      %20 = arith.truncf %19 : vector<8x128xf32> to vector<8x128xbf16>
      %c0_10 = arith.constant 0 : index
      %c0_11 = arith.constant 0 : index
      %21 = vector.load %arg7[%c0_10, %c0_11] : memref<128x1024xbf16, #tpu.memory_space<vmem>>, vector<128x1024xbf16>
      %cst = arith.constant dense<0.000000e+00> : vector<8x1024xf32>
      %22 = tpu.matmul %20, %21, %cst {dimension_numbers = #tpu.dot_dimension_numbers<[1], [0], [0], [1], [0, 0, 1, 1], [], []>} : vector<8x128xbf16>, vector<128x1024xbf16>, vector<8x1024xf32> -> vector<8x1024xf32>
      %c0_12 = arith.constant 0 : index
      %c0_13 = arith.constant 0 : index
      %23 = vector.load %arg8[%c0_12, %c0_13] : memref<1x1024xf32, #tpu.memory_space<vmem>>, vector<1x1024xf32>
      %24 = vector.broadcast %23 : vector<1x1024xf32> to vector<8x1024xf32>
      %25 = arith.addf %22, %24 : vector<8x1024xf32>
      %cst_14 = arith.constant 0.000000e+00 : f32
      %26 = vector.broadcast %cst_14 : f32 to vector<8x1024xf32>
      %27 = arith.subf %26, %25 : vector<8x1024xf32>
      %28 = math.exp %27 : vector<8x1024xf32>
      %cst_15 = arith.constant 1.000000e+00 : f32
      %29 = vector.broadcast %cst_15 : f32 to vector<8x1024xf32>
      %30 = arith.addf %29, %28 : vector<8x1024xf32>
      %31 = tpu.reciprocal %30 {approx = true} : vector<8x1024xf32> -> vector<8x1024xf32>
      %32 = arith.mulf %25, %31 : vector<8x1024xf32>
      %c0_16 = arith.constant 0 : index
      %c0_17 = arith.constant 0 : index
      %33 = vector.load %arg16[%c0_16, %c0_17] : memref<8x128xf32, #tpu.memory_space<vmem>>, vector<8x128xf32>
      %34 = arith.truncf %32 : vector<8x1024xf32> to vector<8x1024xbf16>
      %c0_18 = arith.constant 0 : index
      %c0_19 = arith.constant 0 : index
      %35 = vector.load %arg9[%c0_18, %c0_19] : memref<1024x128xbf16, #tpu.memory_space<vmem>>, vector<1024x128xbf16>
      %cst_20 = arith.constant dense<0.000000e+00> : vector<8x128xf32>
      %36 = tpu.matmul %34, %35, %cst_20 {dimension_numbers = #tpu.dot_dimension_numbers<[1], [0], [0], [1], [0, 0, 1, 1], [], []>} : vector<8x1024xbf16>, vector<1024x128xbf16>, vector<8x128xf32> -> vector<8x128xf32>
      %37 = arith.addf %33, %36 : vector<8x128xf32>
      %c0_21 = arith.constant 0 : index
      %c0_22 = arith.constant 0 : index
      %38 = vector.load %arg16[%c0_21, %c0_22] : memref<8x128xf32, #tpu.memory_space<vmem>>, vector<8x128xf32>
      tpu.vector_store %arg16[%c0_21, %c0_22], %37 {strides = array<i32>} : memref<8x128xf32, #tpu.memory_space<vmem>>, vector<8x128xf32>,
    } else {
    }
    %c1_i32_6 = arith.constant 1 : i32
    %14 = arith.cmpi eq, %arg0, %c1_i32_6 : i32
    %c3_i32_7 = arith.constant 3 : i32
    %15 = arith.cmpi eq, %arg1, %c3_i32_7 : i32
    %16 = arith.andi %14, %15 : i1
    %17 = arith.extui %16 : i1 to i32
    %c0_i32_8 = arith.constant 0 : i32
    %18 = arith.cmpi ne, %17, %c0_i32_8 : i32
    scf.if %18 {
      %c0 = arith.constant 0 : index
      %c0_9 = arith.constant 0 : index
      %19 = vector.load %arg16[%c0, %c0_9] : memref<8x128xf32, #tpu.memory_space<vmem>>, vector<8x128xf32>
      %c0_10 = arith.constant 0 : index
      %c0_11 = arith.constant 0 : index
      %20 = vector.load %arg10[%c0_10, %c0_11] : memref<1x128xf32, #tpu.memory_space<vmem>>, vector<1x128xf32>
      %21 = vector.broadcast %20 : vector<1x128xf32> to vector<8x128xf32>
      %22 = arith.addf %19, %21 : vector<8x128xf32>
      %cst = arith.constant 0.000000e+00 : f32
      %23 = vector.broadcast %cst : f32 to vector<8x128xf32>
      %24 = arith.subf %23, %22 : vector<8x128xf32>
      %25 = math.exp %24 : vector<8x128xf32>
      %cst_12 = arith.constant 1.000000e+00 : f32
      %26 = vector.broadcast %cst_12 : f32 to vector<8x128xf32>
      %27 = arith.addf %26, %25 : vector<8x128xf32>
      %28 = tpu.reciprocal %27 {approx = true} : vector<8x128xf32> -> vector<8x128xf32>
      %29 = arith.mulf %22, %28 : vector<8x128xf32>
      %c0_13 = arith.constant 0 : index
      %c0_14 = arith.constant 0 : index
      %30 = vector.load %arg11[%c0_13, %c0_14] : memref<128x128xf32, #tpu.memory_space<vmem>>, vector<128x128xf32>
      %cst_15 = arith.constant dense<0.000000e+00> : vector<8x128xf32>
      %31 = tpu.matmul %29, %30, %cst_15 {dimension_numbers = #tpu.dot_dimension_numbers<[1], [0], [0], [1], [0, 0, 1, 1], [], []>} : vector<8x128xf32>, vector<128x128xf32>, vector<8x128xf32> -> vector<8x128xf32>
      %c0_16 = arith.constant 0 : index
      %c0_17 = arith.constant 0 : index
      %32 = vector.load %arg12[%c0_16, %c0_17] : memref<1x128xf32, #tpu.memory_space<vmem>>, vector<1x128xf32>
      %33 = vector.broadcast %32 : vector<1x128xf32> to vector<8x128xf32>
      %34 = arith.addf %31, %33 : vector<8x128xf32>
      %cst_18 = arith.constant 0.000000e+00 : f32
      %35 = vector.broadcast %cst_18 : f32 to vector<8x128xf32>
      %36 = arith.subf %35, %34 : vector<8x128xf32>
      %37 = math.exp %36 : vector<8x128xf32>
      %cst_19 = arith.constant 1.000000e+00 : f32
      %38 = vector.broadcast %cst_19 : f32 to vector<8x128xf32>
      %39 = arith.addf %38, %37 : vector<8x128xf32>
      %40 = tpu.reciprocal %39 {approx = true} : vector<8x128xf32> -> vector<8x128xf32>
      %41 = arith.mulf %34, %40 : vector<8x128xf32>
      %c0_20 = arith.constant 0 : index
      %c0_21 = arith.constant 0 : index
      %42 = vector.load %arg13[%c0_20, %c0_21] : memref<128x2xf32, #tpu.memory_space<vmem>>, vector<128x2xf32>
      %cst_22 = arith.constant dense<0.000000e+00> : vector<8x2xf32>
      %43 = tpu.matmul %41, %42, %cst_22 {dimension_numbers = #tpu.dot_dimension_numbers<[1], [0], [0], [1], [0, 0, 1, 1], [], []>} : vector<8x128xf32>, vector<128x2xf32>, vector<8x2xf32> -> vector<8x2xf32>
      %c0_23 = arith.constant 0 : index
      %c0_24 = arith.constant 0 : index
      %44 = vector.load %arg14[%c0_23, %c0_24] : memref<1x2xf32, #tpu.memory_space<vmem>>, vector<1x2xf32>
      %45 = vector.broadcast %44 : vector<1x2xf32> to vector<8x2xf32>
      %46 = arith.addf %43, %45 : vector<8x2xf32>
      %c0_25 = arith.constant 0 : index
      %c0_26 = arith.constant 0 : index
      %47 = vector.load %arg15[%c0_25, %c0_26] : memref<8x2xf32, #tpu.memory_space<vmem>>, vector<8x2xf32>
      tpu.vector_store %arg15[%c0_25, %c0_26], %46 {strides = array<i32>} : memref<8x2xf32, #tpu.memory_space<vmem>>, vector<8x2xf32>,
    } else {
    }
    return
  }
  func.func @transform_0(%arg0: i32, %arg1: i32) -> (i32, i32) {
    %c0_i32 = arith.constant 0 : i32
    %c0_i32_0 = arith.constant 0 : i32
    %c0_i32_1 = arith.constant 0 : i32
    return %c0_i32, %c0_i32_0 : i32, i32
  }
  func.func @transform_1(%arg0: i32, %arg1: i32) -> (i32, i32) {
    %c1_i32 = arith.constant 1 : i32
    %0 = arith.subi %c1_i32, %arg0 : i32
    %1 = arith.muli %arg1, %0 : i32
    %c3_i32 = arith.constant 3 : i32
    %2 = arith.muli %c3_i32, %arg0 : i32
    %3 = arith.addi %1, %2 : i32
    %c0_i32 = arith.constant 0 : i32
    %c0_i32_0 = arith.constant 0 : i32
    return %c0_i32, %3 : i32, i32
  }
  func.func @transform_2(%arg0: i32, %arg1: i32) -> (i32, i32) {
    %c1_i32 = arith.constant 1 : i32
    %0 = arith.subi %c1_i32, %arg0 : i32
    %1 = arith.muli %arg1, %0 : i32
    %c3_i32 = arith.constant 3 : i32
    %2 = arith.muli %c3_i32, %arg0 : i32
    %3 = arith.addi %1, %2 : i32
    %c0_i32 = arith.constant 0 : i32
    %c0_i32_0 = arith.constant 0 : i32
    return %c0_i32, %3 : i32, i32
  }
  func.func @transform_3(%arg0: i32, %arg1: i32) -> (i32, i32) {
    %c1_i32 = arith.constant 1 : i32
    %0 = arith.subi %c1_i32, %arg0 : i32
    %1 = arith.muli %arg1, %0 : i32
    %c3_i32 = arith.constant 3 : i32
    %2 = arith.muli %c3_i32, %arg0 : i32
    %3 = arith.addi %1, %2 : i32
    %c0_i32 = arith.constant 0 : i32
    %c0_i32_0 = arith.constant 0 : i32
    return %3, %c0_i32 : i32, i32
  }
  func.func @transform_4(%arg0: i32, %arg1: i32) -> (i32, i32) {
    %c0_i32 = arith.constant 0 : i32
    %c0_i32_0 = arith.constant 0 : i32
    %c0_i32_1 = arith.constant 0 : i32
    return %c0_i32, %c0_i32_0 : i32, i32
  }
  func.func @transform_5(%arg0: i32, %arg1: i32) -> (i32, i32) {
    %0 = arith.muli %arg1, %arg0 : i32
    %c0_i32 = arith.constant 0 : i32
    %c0_i32_0 = arith.constant 0 : i32
    return %c0_i32, %0 : i32, i32
  }
  func.func @transform_6(%arg0: i32, %arg1: i32) -> (i32, i32) {
    %0 = arith.muli %arg1, %arg0 : i32
    %c0_i32 = arith.constant 0 : i32
    %c0_i32_0 = arith.constant 0 : i32
    return %c0_i32, %0 : i32, i32
  }
  func.func @transform_7(%arg0: i32, %arg1: i32) -> (i32, i32) {
    %0 = arith.muli %arg1, %arg0 : i32
    %c0_i32 = arith.constant 0 : i32
    %c0_i32_0 = arith.constant 0 : i32
    return %0, %c0_i32 : i32, i32
  }
  func.func @transform_8(%arg0: i32, %arg1: i32) -> (i32, i32) {
    %c0_i32 = arith.constant 0 : i32
    %c0_i32_0 = arith.constant 0 : i32
    %c0_i32_1 = arith.constant 0 : i32
    return %c0_i32, %c0_i32_0 : i32, i32
  }
  func.func @transform_9(%arg0: i32, %arg1: i32) -> (i32, i32) {
    %c0_i32 = arith.constant 0 : i32
    %c0_i32_0 = arith.constant 0 : i32
    %c0_i32_1 = arith.constant 0 : i32
    return %c0_i32, %c0_i32_0 : i32, i32
  }
  func.func @transform_10(%arg0: i32, %arg1: i32) -> (i32, i32) {
    %c0_i32 = arith.constant 0 : i32
    %c0_i32_0 = arith.constant 0 : i32
    %c0_i32_1 = arith.constant 0 : i32
    return %c0_i32, %c0_i32_0 : i32, i32
  }
  func.func @transform_11(%arg0: i32, %arg1: i32) -> (i32, i32) {
    %c0_i32 = arith.constant 0 : i32
    %c0_i32_0 = arith.constant 0 : i32
    %c0_i32_1 = arith.constant 0 : i32
    return %c0_i32, %c0_i32_0 : i32, i32
  }
  func.func @transform_12(%arg0: i32, %arg1: i32) -> (i32, i32) {
    %c0_i32 = arith.constant 0 : i32
    %c0_i32_0 = arith.constant 0 : i32
    %c0_i32_1 = arith.constant 0 : i32
    return %c0_i32, %c0_i32_0 : i32, i32
  }
  func.func @transform_13(%arg0: i32, %arg1: i32) -> (i32, i32) {
    %c0_i32 = arith.constant 0 : i32
    %c0_i32_0 = arith.constant 0 : i32
    %c0_i32_1 = arith.constant 0 : i32
    return %c0_i32, %c0_i32_0 : i32, i32
  }
}

</mosaic_0001>

<llo_original>
// kernel: network_forward.1
$region0: #{network_forward.1}
  #allocation0 [shape = 'u32[]', space=smem, size = 0x4, offset = 0x4, fixed_abs, tag = 'smem constant byte address 0x4 - core index']
  #allocation1 [shape = 'u32[72,128]{1,0:T(1,128)}', space=vmem, size = 0x9000, scoped, tag = 'internal scratch']
  #allocation2 [shape = 'f32[8,128]{1,0:T(8,128)}', space=vmem, size = 0x1000, scoped, tag = 'scratch operand']
  #allocation3 [shape = 'f32[8,128]{1,0:T(8,128)}', space=vmem, size = 0x1000, scoped, tag = 'scratch operand']
  %s0 = inlined_call_operand.vmem [shape: f32[8,128], index: 0, kind: input, shape index: {}]
  %s1 = inlined_call_operand.hbm [shape: bf16[128,4096], index: 1, kind: input, shape index: {}]
  %s2 = inlined_call_operand.hbm [shape: f32[1,4096], index: 2, kind: input, shape index: {}]
  %s3 = inlined_call_operand.hbm [shape: bf16[4096,128], index: 3, kind: input, shape index: {}]
  %s4 = inlined_call_operand.vmem [shape: f32[1,128], index: 4, kind: input, shape index: {}]
  %s5 = inlined_call_operand.hbm [shape: bf16[128,4096], index: 5, kind: input, shape index: {}]
  %s6 = inlined_call_operand.hbm [shape: f32[1,4096], index: 6, kind: input, shape index: {}]
  %s7 = inlined_call_operand.hbm [shape: bf16[4096,128], index: 7, kind: input, shape index: {}]
  %s8 = inlined_call_operand.vmem [shape: f32[1,128], index: 8, kind: input, shape index: {}]
  %s9 = inlined_call_operand.vmem [shape: f32[128,128], index: 9, kind: input, shape index: {}]
  %s10 = inlined_call_operand.vmem [shape: f32[1,128], index: 10, kind: input, shape index: {}]
  %s11 = inlined_call_operand.vmem [shape: f32[128,2], index: 11, kind: input, shape index: {}]
  %s12 = inlined_call_operand.vmem [shape: f32[1,2], index: 12, kind: input, shape index: {}]
  %s13 = inlined_call_operand.vmem [shape: f32[8,2], index: 13, kind: output, shape index: {}]
  %s14 = sld [smem:[#allocation0]]
  $region129: #{network_forward.1} parent=0
    _
  %s16 = ssub.s32 1, %s14
  %s17 = scalar_select 0, %s16, %s14
  $region1: #{network_forward.1} parent=0
    #allocation4 [shape = 'u8[524288]{0}', space=vmem, size = 0x80000, scoped, tag = 'input window, operand 1']
    #allocation5 [shape = 's32[2]{0}', space=sflag, size = 0x8, scoped, tag = 'scoped memory for network_forward.1']
    #allocation6 [shape = 'u8[8192]{0}', space=vmem, size = 0x2000, scoped, tag = 'input window, operand 2']
    #allocation7 [shape = 's32[2]{0}', space=sflag, size = 0x8, scoped, tag = 'scoped memory for network_forward.1']
    #allocation8 [shape = 'u8[524288]{0}', space=vmem, size = 0x80000, scoped, tag = 'input window, operand 3']
    #allocation9 [shape = 'u8[524288]{0}', space=vmem, size = 0x80000, scoped, tag = 'input window, operand 5']
    #allocation10 [shape = 's32[2]{0}', space=sflag, size = 0x8, scoped, tag = 'scoped memory for network_forward.1']
    #allocation11 [shape = 'u8[8192]{0}', space=vmem, size = 0x2000, scoped, tag = 'input window, operand 6']
    #allocation12 [shape = 'u8[524288]{0}', space=vmem, size = 0x80000, scoped, tag = 'input window, operand 7']
    #allocation13 [shape = 's32[2]{0}', space=sflag, size = 0x8, scoped, tag = 'scoped memory for network_forward.1']
    %18 = vsyncpa [#allocation5], 0
    %s19 = scalar_lea.sflag [#allocation5], 1
    %20 = vsyncpa %s19, 0
    %21 = vsyncpa [#allocation7], 0
    %s22 = scalar_lea.sflag [#allocation7], 1
    %23 = vsyncpa %s22, 0
    %24 = vsyncpa [#allocation10], 0
    %s25 = scalar_lea.sflag [#allocation10], 1
    %26 = vsyncpa %s25, 0
    %27 = vsyncpa [#allocation13], 0
    %s28 = scalar_lea.sflag [#allocation13], 1
    %29 = vsyncpa %s28, 0
    loop: start=0, step=1, limit=10
    $region2: #{network_forward.1} parent=1 // loop_pre_header
      _
    $region3: #{network_forward.1} parent=1 // loop_header
      %s31 = sphi 0, %s35
      %p32 = scmp.ge.s32.totalorder %s31, 10
      %s38 = sphi 0, %s50
      %s39 = sphi 0, %s46
      %s40 = sphi 0, %s38
      %s41 = sphi 0, %s39
      %s42 = sphi 0, %s40
      %s43 = sphi 0, %s41
      %s51 = sphi 0, %s51
      %s53 = sphi 0, %s51
      %s54 = sphi 0, %s53
      %s68 = sphi 0, %s54
      %s82 = sphi 0, %s84
      %s85 = sphi 0, %s82
      %s86 = sphi 0, %s85
      %s102 = sphi 0, %s86
      %s116 = sphi 0, %s118
      %s119 = sphi 0, %s116
      %s120 = sphi 0, %s119
      %s136 = sphi 0, %s120
      %s150 = sphi 0, %s152
      %s153 = sphi 0, %s150
      %s154 = sphi 0, %s153
      %s170 = sphi 0, %s154
      %s174 = sphi 0, %s174
      %s176 = sphi 0, %s174
      %s177 = sphi 0, %s176
      %s191 = sphi 0, %s177
      %s199 = sphi 0, %s201
      %s202 = sphi 0, %s199
      %s203 = sphi 0, %s202
      %s219 = sphi 0, %s203
      %s227 = sphi 0, %s229
      %s230 = sphi 0, %s227
      %s231 = sphi 0, %s230
      %s247 = sphi 0, %s231
      %s255 = sphi 0, %s257
      %s258 = sphi 0, %s255
      %s259 = sphi 0, %s258
      %s275 = sphi 0, %s259
      %s279 = sphi 0, %s279
      %s281 = sphi 0, %s279
      %s282 = sphi 0, %s281
      %s296 = sphi 0, %s282
      %s300 = sphi 0, %s300
      %s302 = sphi 0, %s300
      %s303 = sphi 0, %s302
      %s317 = sphi 0, %s303
      %s321 = sphi 0, %s321
      %s323 = sphi 0, %s321
      %s324 = sphi 0, %s323
      %s338 = sphi 0, %s324
      %s342 = sphi 0, %s342
      %s344 = sphi 0, %s342
      %s345 = sphi 0, %s344
      %s359 = sphi 0, %s345
      %s363 = sphi 0, %s363
      %s365 = sphi 0, %s363
      %s366 = sphi 0, %s365
      %s380 = sphi 0, %s366
      %s384 = sphi 0, %s384
      %s386 = sphi 0, %s384
      %s387 = sphi 0, %s386
      %s401 = sphi 0, %s387
    $region4: #{network_forward.1} parent=1 // loop_header_branch
      %34 = sbr.rel (%p32) target = $region8
    $region5: #{network_forward.1} parent=1 // loop_body
      %s36 = ssub.s32 %s31, 1
      %s37 = ssub.s32 %s31, 2
      %s44 = sadd.s32 1, %s39
      %p45 = scmp.ge.s32.totalorder %s44, 4
      %s46 = scalar_select %p45, 0, %s44
      %s47 = sadd.s32 1, %s38
      %s48 = scalar_select %p45, %s47, %s38
      %p49 = scmp.ge.s32.totalorder %s48, 2
      %s50 = scalar_select %p49, 0, %s48
      %s52 = sadd.s32 %s51, 1
      %p55 = scmp.eq.s32.totalorder %s31, 7
      %p56 = scmp.ne.s32.totalorder %s51, %s53
      %p57 = scmp.eq.s32.totalorder %s31, 0
      %p58 = por %p56, %p57
      %p59 = scmp.ne.s32.totalorder %s51, %s53
      %p60 = scmp.eq.s32.totalorder %s36, 7
      %p61 = por %p59, %p60
      %p62 = scmp.ne.s32.totalorder %s53, %s54
      %p63 = scmp.eq.s32.totalorder %s36, 0
      %p64 = por %p62, %p63
      %p65 = scmp.ne.s32.totalorder %s53, %s54
      %p66 = scmp.eq.s32.totalorder %s37, 7
      %p67 = por %p65, %p66
      %p69 = scmp.ne.s32.totalorder %s54, %s68
      %p70 = scmp.eq.s32.totalorder %s37, 0
      %p71 = por %p69, %p70
      %s72 = ssub.s32 1, %s38
      %s73 = smul.u32 %s39, %s72
      %s74 = smul.u32 %s38, 3
      %s75 = sadd.s32 %s73, %s74
      %s76 = ssub.s32 1, %s50
      %s77 = smul.u32 %s46, %s76
      %s78 = smul.u32 %s50, 3
      %s79 = sadd.s32 %s77, %s78
      %s80 = ssub.s32 %s75, %s79
      %p81 = scmp.eq.s32.totalorder %s80, 0
      %s83 = sadd.s32 %s82, 1
      %s84 = scalar_select %p81, %s82, %s83
      %p87 = pneg %p81
      %p88 = scmp.eq.s32.totalorder %s31, 7
      %p89 = por %p87, %p88
      %p90 = scmp.ne.s32.totalorder %s82, %s85
      %p91 = scmp.eq.s32.totalorder %s31, 0
      %p92 = por %p90, %p91
      %p93 = scmp.ne.s32.totalorder %s82, %s85
      %p94 = scmp.eq.s32.totalorder %s36, 7
      %p95 = por %p93, %p94
      %p96 = scmp.ne.s32.totalorder %s85, %s86
      %p97 = scmp.eq.s32.totalorder %s36, 0
      %p98 = por %p96, %p97
      %p99 = scmp.ne.s32.totalorder %s85, %s86
      %p100 = scmp.eq.s32.totalorder %s37, 7
      %p101 = por %p99, %p100
      %p103 = scmp.ne.s32.totalorder %s86, %s102
      %p104 = scmp.eq.s32.totalorder %s37, 0
      %p105 = por %p103, %p104
      %s106 = ssub.s32 1, %s38
      %s107 = smul.u32 %s39, %s106
      %s108 = smul.u32 %s38, 3
      %s109 = sadd.s32 %s107, %s108
      %s110 = ssub.s32 1, %s50
      %s111 = smul.u32 %s46, %s110
      %s112 = smul.u32 %s50, 3
      %s113 = sadd.s32 %s111, %s112
      %s114 = ssub.s32 %s109, %s113
      %p115 = scmp.eq.s32.totalorder %s114, 0
      %s117 = sadd.s32 %s116, 1
      %s118 = scalar_select %p115, %s116, %s117
      %p121 = pneg %p115
      %p122 = scmp.eq.s32.totalorder %s31, 7
      %p123 = por %p121, %p122
      %p124 = scmp.ne.s32.totalorder %s116, %s119
      %p125 = scmp.eq.s32.totalorder %s31, 0
      %p126 = por %p124, %p125
      %p127 = scmp.ne.s32.totalorder %s116, %s119
      %p128 = scmp.eq.s32.totalorder %s36, 7
      %p129 = por %p127, %p128
      %p130 = scmp.ne.s32.totalorder %s119, %s120
      %p131 = scmp.eq.s32.totalorder %s36, 0
      %p132 = por %p130, %p131
      %p133 = scmp.ne.s32.totalorder %s119, %s120
      %p134 = scmp.eq.s32.totalorder %s37, 7
      %p135 = por %p133, %p134
      %p137 = scmp.ne.s32.totalorder %s120, %s136
      %p138 = scmp.eq.s32.totalorder %s37, 0
      %p139 = por %p137, %p138
      %s140 = ssub.s32 1, %s38
      %s141 = smul.u32 %s39, %s140
      %s142 = smul.u32 %s38, 3
      %s143 = sadd.s32 %s141, %s142
      %s144 = ssub.s32 1, %s50
      %s145 = smul.u32 %s46, %s144
      %s146 = smul.u32 %s50, 3
      %s147 = sadd.s32 %s145, %s146
      %s148 = ssub.s32 %s143, %s147
      %p149 = scmp.eq.s32.totalorder %s148, 0
      %s151 = sadd.s32 %s150, 1
      %s152 = scalar_select %p149, %s150, %s151
      %p155 = pneg %p149
      %p156 = scmp.eq.s32.totalorder %s31, 7
      %p157 = por %p155, %p156
      %p158 = scmp.ne.s32.totalorder %s150, %s153
      %p159 = scmp.eq.s32.totalorder %s31, 0
      %p160 = por %p158, %p159
      %p161 = scmp.ne.s32.totalorder %s150, %s153
      %p162 = scmp.eq.s32.totalorder %s36, 7
      %p163 = por %p161, %p162
      %p164 = scmp.ne.s32.totalorder %s153, %s154
      %p165 = scmp.eq.s32.totalorder %s36, 0
      %p166 = por %p164, %p165
      %p167 = scmp.ne.s32.totalorder %s153, %s154
      %p168 = scmp.eq.s32.totalorder %s37, 7
      %p169 = por %p167, %p168
      %p171 = scmp.ne.s32.totalorder %s154, %s170
      %p172 = scmp.eq.s32.totalorder %s37, 0
      %p173 = por %p171, %p172
      %s175 = sadd.s32 %s174, 1
      %p178 = scmp.eq.s32.totalorder %s31, 7
      %p179 = scmp.ne.s32.totalorder %s174, %s176
      %p180 = scmp.eq.s32.totalorder %s31, 0
      %p181 = por %p179, %p180
      %p182 = scmp.ne.s32.totalorder %s174, %s176
      %p183 = scmp.eq.s32.totalorder %s36, 7
      %p184 = por %p182, %p183
      %p185 = scmp.ne.s32.totalorder %s176, %s177
      %p186 = scmp.eq.s32.totalorder %s36, 0
      %p187 = por %p185, %p186
      %p188 = scmp.ne.s32.totalorder %s176, %s177
      %p189 = scmp.eq.s32.totalorder %s37, 7
      %p190 = por %p188, %p189
      %p192 = scmp.ne.s32.totalorder %s177, %s191
      %p193 = scmp.eq.s32.totalorder %s37, 0
      %p194 = por %p192, %p193
      %s195 = smul.u32 %s39, %s38
      %s196 = smul.u32 %s46, %s50
      %s197 = ssub.s32 %s195, %s196
      %p198 = scmp.eq.s32.totalorder %s197, 0
      %s200 = sadd.s32 %s199, 1
      %s201 = scalar_select %p198, %s199, %s200
      %p204 = pneg %p198
      %p205 = scmp.eq.s32.totalorder %s31, 7
      %p206 = por %p204, %p205
      %p207 = scmp.ne.s32.totalorder %s199, %s202
      %p208 = scmp.eq.s32.totalorder %s31, 0
      %p209 = por %p207, %p208
      %p210 = scmp.ne.s32.totalorder %s199, %s202
      %p211 = scmp.eq.s32.totalorder %s36, 7
      %p212 = por %p210, %p211
      %p213 = scmp.ne.s32.totalorder %s202, %s203
      %p214 = scmp.eq.s32.totalorder %s36, 0
      %p215 = por %p213, %p214
      %p216 = scmp.ne.s32.totalorder %s202, %s203
      %p217 = scmp.eq.s32.totalorder %s37, 7
      %p218 = por %p216, %p217
      %p220 = scmp.ne.s32.totalorder %s203, %s219
      %p221 = scmp.eq.s32.totalorder %s37, 0
      %p222 = por %p220, %p221
      %s223 = smul.u32 %s39, %s38
      %s224 = smul.u32 %s46, %s50
      %s225 = ssub.s32 %s223, %s224
      %p226 = scmp.eq.s32.totalorder %s225, 0
      %s228 = sadd.s32 %s227, 1
      %s229 = scalar_select %p226, %s227, %s228
      %p232 = pneg %p226
      %p233 = scmp.eq.s32.totalorder %s31, 7
      %p234 = por %p232, %p233
      %p235 = scmp.ne.s32.totalorder %s227, %s230
      %p236 = scmp.eq.s32.totalorder %s31, 0
      %p237 = por %p235, %p236
      %p238 = scmp.ne.s32.totalorder %s227, %s230
      %p239 = scmp.eq.s32.totalorder %s36, 7
      %p240 = por %p238, %p239
      %p241 = scmp.ne.s32.totalorder %s230, %s231
      %p242 = scmp.eq.s32.totalorder %s36, 0
      %p243 = por %p241, %p242
      %p244 = scmp.ne.s32.totalorder %s230, %s231
      %p245 = scmp.eq.s32.totalorder %s37, 7
      %p246 = por %p244, %p245
      %p248 = scmp.ne.s32.totalorder %s231, %s247
      %p249 = scmp.eq.s32.totalorder %s37, 0
      %p250 = por %p248, %p249
      %s251 = smul.u32 %s39, %s38
      %s252 = smul.u32 %s46, %s50
      %s253 = ssub.s32 %s251, %s252
      %p254 = scmp.eq.s32.totalorder %s253, 0
      %s256 = sadd.s32 %s255, 1
      %s257 = scalar_select %p254, %s255, %s256
      %p260 = pneg %p254
      %p261 = scmp.eq.s32.totalorder %s31, 7
      %p262 = por %p260, %p261
      %p263 = scmp.ne.s32.totalorder %s255, %s258
      %p264 = scmp.eq.s32.totalorder %s31, 0
      %p265 = por %p263, %p264
      %p266 = scmp.ne.s32.totalorder %s255, %s258
      %p267 = scmp.eq.s32.totalorder %s36, 7
      %p268 = por %p266, %p267
      %p269 = scmp.ne.s32.totalorder %s258, %s259
      %p270 = scmp.eq.s32.totalorder %s36, 0
      %p271 = por %p269, %p270
      %p272 = scmp.ne.s32.totalorder %s258, %s259
      %p273 = scmp.eq.s32.totalorder %s37, 7
      %p274 = por %p272, %p273
      %p276 = scmp.ne.s32.totalorder %s259, %s275
      %p277 = scmp.eq.s32.totalorder %s37, 0
      %p278 = por %p276, %p277
      %s280 = sadd.s32 %s279, 1
      %p283 = scmp.eq.s32.totalorder %s31, 7
      %p284 = scmp.ne.s32.totalorder %s279, %s281
      %p285 = scmp.eq.s32.totalorder %s31, 0
      %p286 = por %p284, %p285
      %p287 = scmp.ne.s32.totalorder %s279, %s281
      %p288 = scmp.eq.s32.totalorder %s36, 7
      %p289 = por %p287, %p288
      %p290 = scmp.ne.s32.totalorder %s281, %s282
      %p291 = scmp.eq.s32.totalorder %s36, 0
      %p292 = por %p290, %p291
      %p293 = scmp.ne.s32.totalorder %s281, %s282
      %p294 = scmp.eq.s32.totalorder %s37, 7
      %p295 = por %p293, %p294
      %p297 = scmp.ne.s32.totalorder %s282, %s296
      %p298 = scmp.eq.s32.totalorder %s37, 0
      %p299 = por %p297, %p298
      %s301 = sadd.s32 %s300, 1
      %p304 = scmp.eq.s32.totalorder %s31, 7
      %p305 = scmp.ne.s32.totalorder %s300, %s302
      %p306 = scmp.eq.s32.totalorder %s31, 0
      %p307 = por %p305, %p306
      %p308 = scmp.ne.s32.totalorder %s300, %s302
      %p309 = scmp.eq.s32.totalorder %s36, 7
      %p310 = por %p308, %p309
      %p311 = scmp.ne.s32.totalorder %s302, %s303
      %p312 = scmp.eq.s32.totalorder %s36, 0
      %p313 = por %p311, %p312
      %p314 = scmp.ne.s32.totalorder %s302, %s303
      %p315 = scmp.eq.s32.totalorder %s37, 7
      %p316 = por %p314, %p315
      %p318 = scmp.ne.s32.totalorder %s303, %s317
      %p319 = scmp.eq.s32.totalorder %s37, 0
      %p320 = por %p318, %p319
      %s322 = sadd.s32 %s321, 1
      %p325 = scmp.eq.s32.totalorder %s31, 7
      %p326 = scmp.ne.s32.totalorder %s321, %s323
      %p327 = scmp.eq.s32.totalorder %s31, 0
      %p328 = por %p326, %p327
      %p329 = scmp.ne.s32.totalorder %s321, %s323
      %p330 = scmp.eq.s32.totalorder %s36, 7
      %p331 = por %p329, %p330
      %p332 = scmp.ne.s32.totalorder %s323, %s324
      %p333 = scmp.eq.s32.totalorder %s36, 0
      %p334 = por %p332, %p333
      %p335 = scmp.ne.s32.totalorder %s323, %s324
      %p336 = scmp.eq.s32.totalorder %s37, 7
      %p337 = por %p335, %p336
      %p339 = scmp.ne.s32.totalorder %s324, %s338
      %p340 = scmp.eq.s32.totalorder %s37, 0
      %p341 = por %p339, %p340
      %s343 = sadd.s32 %s342, 1
      %p346 = scmp.eq.s32.totalorder %s31, 7
      %p347 = scmp.ne.s32.totalorder %s342, %s344
      %p348 = scmp.eq.s32.totalorder %s31, 0
      %p349 = por %p347, %p348
      %p350 = scmp.ne.s32.totalorder %s342, %s344
      %p351 = scmp.eq.s32.totalorder %s36, 7
      %p352 = por %p350, %p351
      %p353 = scmp.ne.s32.totalorder %s344, %s345
      %p354 = scmp.eq.s32.totalorder %s36, 0
      %p355 = por %p353, %p354
      %p356 = scmp.ne.s32.totalorder %s344, %s345
      %p357 = scmp.eq.s32.totalorder %s37, 7
      %p358 = por %p356, %p357
      %p360 = scmp.ne.s32.totalorder %s345, %s359
      %p361 = scmp.eq.s32.totalorder %s37, 0
      %p362 = por %p360, %p361
      %s364 = sadd.s32 %s363, 1
      %p367 = scmp.eq.s32.totalorder %s31, 7
      %p368 = scmp.ne.s32.totalorder %s363, %s365
      %p369 = scmp.eq.s32.totalorder %s31, 0
      %p370 = por %p368, %p369
      %p371 = scmp.ne.s32.totalorder %s363, %s365
      %p372 = scmp.eq.s32.totalorder %s36, 7
      %p373 = por %p371, %p372
      %p374 = scmp.ne.s32.totalorder %s365, %s366
      %p375 = scmp.eq.s32.totalorder %s36, 0
      %p376 = por %p374, %p375
      %p377 = scmp.ne.s32.totalorder %s365, %s366
      %p378 = scmp.eq.s32.totalorder %s37, 7
      %p379 = por %p377, %p378
      %p381 = scmp.ne.s32.totalorder %s366, %s380
      %p382 = scmp.eq.s32.totalorder %s37, 0
      %p383 = por %p381, %p382
      %s385 = sadd.s32 %s384, 1
      %p388 = scmp.eq.s32.totalorder %s31, 7
      %p389 = scmp.ne.s32.totalorder %s384, %s386
      %p390 = scmp.eq.s32.totalorder %s31, 0
      %p391 = por %p389, %p390
      %p392 = scmp.ne.s32.totalorder %s384, %s386
      %p393 = scmp.eq.s32.totalorder %s36, 7
      %p394 = por %p392, %p393
      %p395 = scmp.ne.s32.totalorder %s386, %s387
      %p396 = scmp.eq.s32.totalorder %s36, 0
      %p397 = por %p395, %p396
      %p398 = scmp.ne.s32.totalorder %s386, %s387
      %p399 = scmp.eq.s32.totalorder %s37, 7
      %p400 = por %p398, %p399
      %p402 = scmp.ne.s32.totalorder %s387, %s401
      %p403 = scmp.eq.s32.totalorder %s37, 0
      %p404 = por %p402, %p403
      %p405 = scmp.le.s32.totalorder 1, %s31
      %p406 = scmp.lt.s32.totalorder %s31, 9
      %p407 = pnand %p405, %p406
      %p408 = pneg %p407
      // Predicated region
      $region9: #{network_forward.1} parent=5 // pred_check
        _
      $region10: #{network_forward.1} parent=5 // pred_check_branch
        %410 = sbr.rel (%p407) target = $region12
      $region11: #{network_forward.1} parent=5 // pred_region
        %s411 = ssub.s32 %s31, 1
        // Predicated region
        $region13: #{network_forward.1} parent=11 // pred_check
          %p412 = pneg %p64
        $region14: #{network_forward.1} parent=11 // pred_check_branch
          %414 = sbr.rel (%p412) target = $region16
        $region15: #{network_forward.1} parent=11 // pred_region
          _
        $region16: #{network_forward.1} parent=11 // pred_fallthru
          _
        // Predicated region
        $region17: #{network_forward.1} parent=11 // pred_check
          %p415 = pneg %p187
        $region18: #{network_forward.1} parent=11 // pred_check_branch
          %417 = sbr.rel (%p415) target = $region20
        $region19: #{network_forward.1} parent=11 // pred_region
          _
        $region20: #{network_forward.1} parent=11 // pred_fallthru
          _
        // Predicated region
        $region21: #{network_forward.1} parent=11 // pred_check
          %p418 = pneg %p292
        $region22: #{network_forward.1} parent=11 // pred_check_branch
          %420 = sbr.rel (%p418) target = $region24
        $region23: #{network_forward.1} parent=11 // pred_region
          _
        $region24: #{network_forward.1} parent=11 // pred_fallthru
          _
        // Predicated region
        $region25: #{network_forward.1} parent=11 // pred_check
          %p421 = pneg %p313
        $region26: #{network_forward.1} parent=11 // pred_check_branch
          %423 = sbr.rel (%p421) target = $region28
        $region27: #{network_forward.1} parent=11 // pred_region
          _
        $region28: #{network_forward.1} parent=11 // pred_fallthru
          _
        // Predicated region
        $region29: #{network_forward.1} parent=11 // pred_check
          %p424 = pneg %p334
        $region30: #{network_forward.1} parent=11 // pred_check_branch
          %426 = sbr.rel (%p424) target = $region32
        $region31: #{network_forward.1} parent=11 // pred_region
          _
        $region32: #{network_forward.1} parent=11 // pred_fallthru
          _
        // Predicated region
        $region33: #{network_forward.1} parent=11 // pred_check
          %p427 = pneg %p355
        $region34: #{network_forward.1} parent=11 // pred_check_branch
          %429 = sbr.rel (%p427) target = $region36
        $region35: #{network_forward.1} parent=11 // pred_region
          _
        $region36: #{network_forward.1} parent=11 // pred_fallthru
          _
        // Predicated region
        $region37: #{network_forward.1} parent=11 // pred_check
          %p430 = pneg %p376
        $region38: #{network_forward.1} parent=11 // pred_check_branch
          %432 = sbr.rel (%p430) target = $region40
        $region39: #{network_forward.1} parent=11 // pred_region
          _
        $region40: #{network_forward.1} parent=11 // pred_fallthru
          _
      $region12: #{network_forward.1} parent=5 // pred_fallthru
        _
      %p433 = scmp.lt.s32.totalorder %s31, 8
      // Predicated region
      $region41: #{network_forward.1} parent=5 // pred_check
        %p434 = pneg %p433
      $region42: #{network_forward.1} parent=5 // pred_check_branch
        %436 = sbr.rel (%p434) target = $region44
      $region43: #{network_forward.1} parent=5 // pred_region
        // Predicated region
        $region45: #{network_forward.1} parent=43 // pred_check
          %p437 = pneg %p92
        $region46: #{network_forward.1} parent=43 // pred_check_branch
          %439 = sbr.rel (%p437) target = $region48
        $region47: #{network_forward.1} parent=43 // pred_region
          %s440 = sand.u32 %s82, 1
          %s441 = scalar_lea.sflag [#allocation5], %s440
          %s442 = sand.u32 %s82, 1
          %s443 = smul.addr %s442, 512
          %s444 = scalar_lea.vmem [#allocation4], %s443
          %s445 = ssub.s32 1, %s38
          %s446 = smul.u32 %s39, %s445
          %s447 = smul.u32 %s38, 3
          %s448 = sadd.s32 %s446, %s447
          %s449 = smul.u32 8, %s448
          %451 = vsyncadd %s441, 0
          %s452 = smul.addr %s449, 4
          %s453 = scalar_lea.hbm %s1, %s452
          %s454 = sshll.u32 %s453, 4
          %s455 = int_to_ptr.hbm [resolvable:$true] %s454
          %s456 = sshll.u32 %s444, 4
          %s457 = int_to_ptr.vmem [resolvable:$true] %s456
          %462 = dma.hbm_to_vmem [thread:$0]  %s455, 8192, %s457, %s441, 2048, 512, 32
        $region48: #{network_forward.1} parent=43 // pred_fallthru
          _
        // Predicated region
        $region49: #{network_forward.1} parent=43 // pred_check
          %p463 = pneg %p126
        $region50: #{network_forward.1} parent=43 // pred_check_branch
          %465 = sbr.rel (%p463) target = $region52
        $region51: #{network_forward.1} parent=43 // pred_region
          %s466 = sand.u32 %s31, 1
          %s467 = scalar_lea.sflag [#allocation7], %s466
          %s468 = sand.u32 %s116, 1
          %s469 = smul.addr %s468, 8
          %s470 = scalar_lea.vmem [#allocation6], %s469
          %s471 = ssub.s32 1, %s38
          %s472 = smul.u32 %s39, %s471
          %s473 = smul.u32 %s38, 3
          %s474 = sadd.s32 %s472, %s473
          %s475 = smul.u32 8, %s474
          %477 = vsyncadd %s467, 0
          %s478 = scalar_lea.hbm %s2, %s475
          %s480 = sshll.u32 %s478, 4
          %s481 = int_to_ptr.hbm [resolvable:$true] %s480
          %s482 = sshll.u32 %s470, 4
          %s483 = int_to_ptr.vmem [resolvable:$true] %s482
          %485 = dma.hbm_to_vmem [thread:$0]  %s481, 128, %s483, %s467
        $region52: #{network_forward.1} parent=43 // pred_fallthru
          _
        // Predicated region
        $region53: #{network_forward.1} parent=43 // pred_check
          %p486 = pneg %p160
        $region54: #{network_forward.1} parent=43 // pred_check_branch
          %488 = sbr.rel (%p486) target = $region56
        $region55: #{network_forward.1} parent=43 // pred_region
          %s489 = sand.u32 %s31, 1
          %s490 = scalar_lea.sflag [#allocation7], %s489
          %s491 = sand.u32 %s150, 1
          %s492 = smul.addr %s491, 512
          %s493 = scalar_lea.vmem [#allocation8], %s492
          %s494 = ssub.s32 1, %s38
          %s495 = smul.u32 %s39, %s494
          %s496 = smul.u32 %s38, 3
          %s497 = sadd.s32 %s495, %s496
          %s498 = smul.u32 128, %s497
          %500 = vsyncadd %s490, 0
          %s501 = smul.addr %s498, 4
          %s502 = scalar_lea.hbm %s3, %s501
          %s503 = sshll.u32 %s502, 4
          %s504 = int_to_ptr.hbm [resolvable:$true] %s503
          %s505 = sshll.u32 %s493, 4
          %s506 = int_to_ptr.vmem [resolvable:$true] %s505
          %511 = dma.hbm_to_vmem [thread:$0]  %s504, 8192, %s506, %s490, 64, 64, 4
        $region56: #{network_forward.1} parent=43 // pred_fallthru
          _
        // Predicated region
        $region57: #{network_forward.1} parent=43 // pred_check
          %p512 = pneg %p209
        $region58: #{network_forward.1} parent=43 // pred_check_branch
          %514 = sbr.rel (%p512) target = $region60
        $region59: #{network_forward.1} parent=43 // pred_region
          %s515 = sand.u32 %s31, 1
          %s516 = scalar_lea.sflag [#allocation10], %s515
          %s517 = sand.u32 %s199, 1
          %s518 = smul.addr %s517, 512
          %s519 = scalar_lea.vmem [#allocation9], %s518
          %s520 = smul.u32 %s39, %s38
          %s521 = smul.u32 8, %s520
          %523 = vsyncadd %s516, 0
          %s524 = smul.addr %s521, 4
          %s525 = scalar_lea.hbm %s5, %s524
          %s526 = sshll.u32 %s525, 4
          %s527 = int_to_ptr.hbm [resolvable:$true] %s526
          %s528 = sshll.u32 %s519, 4
          %s529 = int_to_ptr.vmem [resolvable:$true] %s528
          %534 = dma.hbm_to_vmem [thread:$0]  %s527, 8192, %s529, %s516, 2048, 512, 32
        $region60: #{network_forward.1} parent=43 // pred_fallthru
          _
        // Predicated region
        $region61: #{network_forward.1} parent=43 // pred_check
          %p535 = pneg %p237
        $region62: #{network_forward.1} parent=43 // pred_check_branch
          %537 = sbr.rel (%p535) target = $region64
        $region63: #{network_forward.1} parent=43 // pred_region
          %s538 = sand.u32 %s31, 1
          %s539 = scalar_lea.sflag [#allocation10], %s538
          %s540 = sand.u32 %s227, 1
          %s541 = smul.addr %s540, 8
          %s542 = scalar_lea.vmem [#allocation11], %s541
          %s543 = smul.u32 %s39, %s38
          %s544 = smul.u32 8, %s543
          %546 = vsyncadd %s539, 0
          %s547 = scalar_lea.hbm %s6, %s544
          %s549 = sshll.u32 %s547, 4
          %s550 = int_to_ptr.hbm [resolvable:$true] %s549
          %s551 = sshll.u32 %s542, 4
          %s552 = int_to_ptr.vmem [resolvable:$true] %s551
          %554 = dma.hbm_to_vmem [thread:$0]  %s550, 128, %s552, %s539
        $region64: #{network_forward.1} parent=43 // pred_fallthru
          _
        // Predicated region
        $region65: #{network_forward.1} parent=43 // pred_check
          %p555 = pneg %p265
        $region66: #{network_forward.1} parent=43 // pred_check_branch
          %557 = sbr.rel (%p555) target = $region68
        $region67: #{network_forward.1} parent=43 // pred_region
          %s558 = sand.u32 %s255, 1
          %s559 = scalar_lea.sflag [#allocation13], %s558
          %s560 = sand.u32 %s255, 1
          %s561 = smul.addr %s560, 512
          %s562 = scalar_lea.vmem [#allocation12], %s561
          %s563 = smul.u32 %s39, %s38
          %s564 = smul.u32 128, %s563
          %566 = vsyncadd %s559, 0
          %s567 = smul.addr %s564, 4
          %s568 = scalar_lea.hbm %s7, %s567
          %s569 = sshll.u32 %s568, 4
          %s570 = int_to_ptr.hbm [resolvable:$true] %s569
          %s571 = sshll.u32 %s562, 4
          %s572 = int_to_ptr.vmem [resolvable:$true] %s571
          %577 = dma.hbm_to_vmem [thread:$0]  %s570, 8192, %s572, %s559, 64, 64, 4
        $region68: #{network_forward.1} parent=43 // pred_fallthru
          _
      $region44: #{network_forward.1} parent=5 // pred_fallthru
        _
      %p578 = scmp.le.s32.totalorder 1, %s31
      %p579 = scmp.lt.s32.totalorder %s31, 9
      %p580 = pnand %p578, %p579
      %p581 = pneg %p580
      // Predicated region
      $region69: #{network_forward.1} parent=5 // pred_check
        _
      $region70: #{network_forward.1} parent=5 // pred_check_branch
        %583 = sbr.rel (%p580) target = $region72
      $region71: #{network_forward.1} parent=5 // pred_region
        %s584 = ssub.s32 %s31, 1
        %s585 = sand.u32 %s85, 1
        %s586 = scalar_lea.sflag [#allocation5], %s585
        %s587 = sand.u32 %s85, 1
        %s588 = smul.addr %s587, 512
        %s589 = scalar_lea.vmem [#allocation4], %s588
        // Predicated region
        $region73: #{network_forward.1} parent=71 // pred_check
          %p590 = pneg %p98
        $region74: #{network_forward.1} parent=71 // pred_check_branch
          %592 = sbr.rel (%p590) target = $region76
        $region75: #{network_forward.1} parent=71 // pred_region
          %594 = dma.done %s586, 8192
        $region76: #{network_forward.1} parent=71 // pred_fallthru
          _
        %s595 = sand.u32 %s36, 1
        %s596 = scalar_lea.sflag [#allocation7], %s595
        %s597 = sand.u32 %s119, 1
        %s598 = smul.addr %s597, 8
        %s599 = scalar_lea.vmem [#allocation6], %s598
        // Predicated region
        $region77: #{network_forward.1} parent=71 // pred_check
          %p600 = pneg %p132
        $region78: #{network_forward.1} parent=71 // pred_check_branch
          %602 = sbr.rel (%p600) target = $region80
        $region79: #{network_forward.1} parent=71 // pred_region
          %604 = dma.done %s596, 128
        $region80: #{network_forward.1} parent=71 // pred_fallthru
          _
        %s605 = sand.u32 %s36, 1
        %s606 = scalar_lea.sflag [#allocation7], %s605
        %s607 = sand.u32 %s153, 1
        %s608 = smul.addr %s607, 512
        %s609 = scalar_lea.vmem [#allocation8], %s608
        // Predicated region
        $region81: #{network_forward.1} parent=71 // pred_check
          %p610 = pneg %p166
        $region82: #{network_forward.1} parent=71 // pred_check_branch
          %612 = sbr.rel (%p610) target = $region84
        $region83: #{network_forward.1} parent=71 // pred_region
          %614 = dma.done %s606, 8192
        $region84: #{network_forward.1} parent=71 // pred_fallthru
          _
        %s615 = sand.u32 %s36, 1
        %s616 = scalar_lea.sflag [#allocation10], %s615
        %s617 = sand.u32 %s202, 1
        %s618 = smul.addr %s617, 512
        %s619 = scalar_lea.vmem [#allocation9], %s618
        // Predicated region
        $region85: #{network_forward.1} parent=71 // pred_check
          %p620 = pneg %p215
        $region86: #{network_forward.1} parent=71 // pred_check_branch
          %622 = sbr.rel (%p620) target = $region88
        $region87: #{network_forward.1} parent=71 // pred_region
          %624 = dma.done %s616, 8192
        $region88: #{network_forward.1} parent=71 // pred_fallthru
          _
        %s625 = sand.u32 %s36, 1
        %s626 = scalar_lea.sflag [#allocation10], %s625
        %s627 = sand.u32 %s230, 1
        %s628 = smul.addr %s627, 8
        %s629 = scalar_lea.vmem [#allocation11], %s628
        // Predicated region
        $region89: #{network_forward.1} parent=71 // pred_check
          %p630 = pneg %p243
        $region90: #{network_forward.1} parent=71 // pred_check_branch
          %632 = sbr.rel (%p630) target = $region92
        $region91: #{network_forward.1} parent=71 // pred_region
          %634 = dma.done %s626, 128
        $region92: #{network_forward.1} parent=71 // pred_fallthru
          _
        %s635 = sand.u32 %s258, 1
        %s636 = scalar_lea.sflag [#allocation13], %s635
        %s637 = sand.u32 %s258, 1
        %s638 = smul.addr %s637, 512
        %s639 = scalar_lea.vmem [#allocation12], %s638
        // Predicated region
        $region93: #{network_forward.1} parent=71 // pred_check
          %p640 = pneg %p271
        $region94: #{network_forward.1} parent=71 // pred_check_branch
          %642 = sbr.rel (%p640) target = $region96
        $region95: #{network_forward.1} parent=71 // pred_region
          %644 = dma.done %s636, 8192
        $region96: #{network_forward.1} parent=71 // pred_fallthru
          _
        %p645 = pneg %p64
        %p646 = pneg %p61
        %s647 = sand.u32 %s85, 1
        %s648 = scalar_lea.sflag [#allocation5], %s647
        %s649 = sand.u32 %s85, 1
        %s650 = smul.addr %s649, 512
        %s651 = scalar_lea.vmem [#allocation4], %s650
        %p652 = pneg %p98
        %p653 = pneg %p95
        %s654 = sand.u32 %s36, 1
        %s655 = scalar_lea.sflag [#allocation7], %s654
        %s656 = sand.u32 %s119, 1
        %s657 = smul.addr %s656, 8
        %s658 = scalar_lea.vmem [#allocation6], %s657
        %p659 = pneg %p132
        %p660 = pneg %p129
        %s661 = sand.u32 %s36, 1
        %s662 = scalar_lea.sflag [#allocation7], %s661
        %s663 = sand.u32 %s153, 1
        %s664 = smul.addr %s663, 512
        %s665 = scalar_lea.vmem [#allocation8], %s664
        %p666 = pneg %p166
        %p667 = pneg %p163
        %p668 = pneg %p187
        %p669 = pneg %p184
        %s670 = sand.u32 %s36, 1
        %s671 = scalar_lea.sflag [#allocation10], %s670
        %s672 = sand.u32 %s202, 1
        %s673 = smul.addr %s672, 512
        %s674 = scalar_lea.vmem [#allocation9], %s673
        %p675 = pneg %p215
        %p676 = pneg %p212
        %s677 = sand.u32 %s36, 1
        %s678 = scalar_lea.sflag [#allocation10], %s677
        %s679 = sand.u32 %s230, 1
        %s680 = smul.addr %s679, 8
        %s681 = scalar_lea.vmem [#allocation11], %s680
        %p682 = pneg %p243
        %p683 = pneg %p240
        %s684 = sand.u32 %s258, 1
        %s685 = scalar_lea.sflag [#allocation13], %s684
        %s686 = sand.u32 %s258, 1
        %s687 = smul.addr %s686, 512
        %s688 = scalar_lea.vmem [#allocation12], %s687
        %p689 = pneg %p271
        %p690 = pneg %p268
        %p691 = pneg %p292
        %p692 = pneg %p289
        %p693 = pneg %p313
        %p694 = pneg %p310
        %p695 = pneg %p334
        %p696 = pneg %p331
        %p697 = pneg %p355
        %p698 = pneg %p352
        %p699 = pneg %p376
        %p700 = pneg %p373
        %p701 = pneg %p397
        %p702 = pneg %p394
        %s703 = ssub.s32 1, %s40
        %s704 = smul.u32 %s41, %s703
        %s705 = smul.u32 %s40, 3
        %s706 = sadd.s32 %s704, %s705
        %s707 = smul.u32 8, %s706
        %s708 = ssub.s32 1, %s40
        %s709 = smul.u32 %s41, %s708
        %s710 = smul.u32 %s40, 3
        %s711 = sadd.s32 %s709, %s710
        %s712 = smul.u32 8, %s711
        %s713 = ssub.s32 1, %s40
        %s714 = smul.u32 %s41, %s713
        %s715 = smul.u32 %s40, 3
        %s716 = sadd.s32 %s714, %s715
        %s717 = smul.u32 128, %s716
        %s718 = smul.u32 %s41, %s40
        %s719 = smul.u32 8, %s718
        %s720 = smul.u32 %s41, %s40
        %s721 = smul.u32 8, %s720
        %s722 = smul.u32 %s41, %s40
        %s723 = smul.u32 128, %s722
        %p724 = scmp.eq.s32.totalorder %s41, 0
        // Predicated region
        $region97: #{network_forward.1} parent=71 // pred_check
          %p725 = pneg %p724
        $region98: #{network_forward.1} parent=71 // pred_check_branch
          %727 = sbr.rel (%p725) target = $region100
        $region99: #{network_forward.1} parent=71 // pred_region
          %728 = vst [vmem:[#allocation2] sm:$0xff] 0.0
        $region100: #{network_forward.1} parent=71 // pred_fallthru
          _
        %p729 = scmp.eq.s32.totalorder %s40, 0
        // Predicated region
        $region101: #{network_forward.1} parent=71 // pred_check
          %p730 = pneg %p729
        $region102: #{network_forward.1} parent=71 // pred_check_branch
          %732 = sbr.rel (%p730) target = $region104
        $region103: #{network_forward.1} parent=71 // pred_region
          %v733 = vld [vmem:[%s0] sm:$0xff]
          %v734 = vpack.c.bf16 %v733, %v733
          %v735 = vld [vmem:[%s589] sm:$0xff]
          %v736 = vld [vmem:[%s589 + $0x8] sm:$0xff]
          %v737 = vld [vmem:[%s589 + $0x10] sm:$0xff]
          %v738 = vld [vmem:[%s589 + $0x18] sm:$0xff]
          %v739 = vld [vmem:[%s589 + $0x20] sm:$0xff]
          %v740 = vld [vmem:[%s589 + $0x28] sm:$0xff]
          %v741 = vld [vmem:[%s589 + $0x30] sm:$0xff]
          %v742 = vld [vmem:[%s589 + $0x38] sm:$0xff]
          %v743 = vld [vmem:[%s589 + $0x40] sm:$0xff]
          %v744 = vld [vmem:[%s589 + $0x48] sm:$0xff]
          %v745 = vld [vmem:[%s589 + $0x50] sm:$0xff]
          %v746 = vld [vmem:[%s589 + $0x58] sm:$0xff]
          %v747 = vld [vmem:[%s589 + $0x60] sm:$0xff]
          %v748 = vld [vmem:[%s589 + $0x68] sm:$0xff]
          %v749 = vld [vmem:[%s589 + $0x70] sm:$0xff]
          %v750 = vld [vmem:[%s589 + $0x78] sm:$0xff]
          %v751 = vld [vmem:[%s589 + $0x80] sm:$0xff]
          %v752 = vld [vmem:[%s589 + $0x88] sm:$0xff]
          %v753 = vld [vmem:[%s589 + $0x90] sm:$0xff]
          %v754 = vld [vmem:[%s589 + $0x98] sm:$0xff]
          %v755 = vld [vmem:[%s589 + $0xa0] sm:$0xff]
          %v756 = vld [vmem:[%s589 + $0xa8] sm:$0xff]
          %v757 = vld [vmem:[%s589 + $0xb0] sm:$0xff]
          %v758 = vld [vmem:[%s589 + $0xb8] sm:$0xff]
          %v759 = vld [vmem:[%s589 + $0xc0] sm:$0xff]
          %v760 = vld [vmem:[%s589 + $0xc8] sm:$0xff]
          %v761 = vld [vmem:[%s589 + $0xd0] sm:$0xff]
          %v762 = vld [vmem:[%s589 + $0xd8] sm:$0xff]
          %v763 = vld [vmem:[%s589 + $0xe0] sm:$0xff]
          %v764 = vld [vmem:[%s589 + $0xe8] sm:$0xff]
          %v765 = vld [vmem:[%s589 + $0xf0] sm:$0xff]
          %v766 = vld [vmem:[%s589 + $0xf8] sm:$0xff]
          %v767 = vld [vmem:[%s589 + $0x100] sm:$0xff]
          %v768 = vld [vmem:[%s589 + $0x108] sm:$0xff]
          %v769 = vld [vmem:[%s589 + $0x110] sm:$0xff]
          %v770 = vld [vmem:[%s589 + $0x118] sm:$0xff]
          %v771 = vld [vmem:[%s589 + $0x120] sm:$0xff]
          %v772 = vld [vmem:[%s589 + $0x128] sm:$0xff]
          %v773 = vld [vmem:[%s589 + $0x130] sm:$0xff]
          %v774 = vld [vmem:[%s589 + $0x138] sm:$0xff]
          %v775 = vld [vmem:[%s589 + $0x140] sm:$0xff]
          %v776 = vld [vmem:[%s589 + $0x148] sm:$0xff]
          %v777 = vld [vmem:[%s589 + $0x150] sm:$0xff]
          %v778 = vld [vmem:[%s589 + $0x158] sm:$0xff]
          %v779 = vld [vmem:[%s589 + $0x160] sm:$0xff]
          %v780 = vld [vmem:[%s589 + $0x168] sm:$0xff]
          %v781 = vld [vmem:[%s589 + $0x170] sm:$0xff]
          %v782 = vld [vmem:[%s589 + $0x178] sm:$0xff]
          %v783 = vld [vmem:[%s589 + $0x180] sm:$0xff]
          %v784 = vld [vmem:[%s589 + $0x188] sm:$0xff]
          %v785 = vld [vmem:[%s589 + $0x190] sm:$0xff]
          %v786 = vld [vmem:[%s589 + $0x198] sm:$0xff]
          %v787 = vld [vmem:[%s589 + $0x1a0] sm:$0xff]
          %v788 = vld [vmem:[%s589 + $0x1a8] sm:$0xff]
          %v789 = vld [vmem:[%s589 + $0x1b0] sm:$0xff]
          %v790 = vld [vmem:[%s589 + $0x1b8] sm:$0xff]
          %v791 = vld [vmem:[%s589 + $0x1c0] sm:$0xff]
          %v792 = vld [vmem:[%s589 + $0x1c8] sm:$0xff]
          %v793 = vld [vmem:[%s589 + $0x1d0] sm:$0xff]
          %v794 = vld [vmem:[%s589 + $0x1d8] sm:$0xff]
          %v795 = vld [vmem:[%s589 + $0x1e0] sm:$0xff]
          %v796 = vld [vmem:[%s589 + $0x1e8] sm:$0xff]
          %v797 = vld [vmem:[%s589 + $0x1f0] sm:$0xff]
          %v798 = vld [vmem:[%s589 + $0x1f8] sm:$0xff]
          %v799 = vld [vmem:[%s599] sm:$0xff]
          %v801 = vperm.slane %v799, 0
          %v802 = vperm.slane %v799, 1
          %v803 = vperm.slane %v799, 2
          %v804 = vperm.slane %v799, 3
          %v805 = vperm.slane %v799, 4
          %v806 = vperm.slane %v799, 5
          %v807 = vperm.slane %v799, 6
          %v808 = vperm.slane %v799, 7
          %v881 = vunpack.c.l.b16 %v735
          %v882 = vunpack.c.h.b16 %v735
          %v883 = vunpack.c.l.b16 %v736
          %v884 = vunpack.c.h.b16 %v736
          %v885 = vunpack.c.l.b16 %v737
          %v886 = vunpack.c.h.b16 %v737
          %v887 = vunpack.c.l.b16 %v738
          %v888 = vunpack.c.h.b16 %v738
          %v889 = vunpack.c.l.b16 %v739
          %v890 = vunpack.c.h.b16 %v739
          %v891 = vunpack.c.l.b16 %v740
          %v892 = vunpack.c.h.b16 %v740
          %v893 = vunpack.c.l.b16 %v741
          %v894 = vunpack.c.h.b16 %v741
          %v895 = vunpack.c.l.b16 %v742
          %v896 = vunpack.c.h.b16 %v742
          %v897 = vunpack.c.l.b16 %v743
          %v898 = vunpack.c.h.b16 %v743
          %v899 = vunpack.c.l.b16 %v744
          %v900 = vunpack.c.h.b16 %v744
          %v901 = vunpack.c.l.b16 %v745
          %v902 = vunpack.c.h.b16 %v745
          %v903 = vunpack.c.l.b16 %v746
          %v904 = vunpack.c.h.b16 %v746
          %v905 = vunpack.c.l.b16 %v747
          %v906 = vunpack.c.h.b16 %v747
          %v907 = vunpack.c.l.b16 %v748
          %v908 = vunpack.c.h.b16 %v748
          %v909 = vunpack.c.l.b16 %v749
          %v910 = vunpack.c.h.b16 %v749
          %v911 = vunpack.c.l.b16 %v750
          %v912 = vunpack.c.h.b16 %v750
          %v913 = vunpack.c.l.b16 %v751
          %v914 = vunpack.c.h.b16 %v751
          %v915 = vunpack.c.l.b16 %v752
          %v916 = vunpack.c.h.b16 %v752
          %v917 = vunpack.c.l.b16 %v753
          %v918 = vunpack.c.h.b16 %v753
          %v919 = vunpack.c.l.b16 %v754
          %v920 = vunpack.c.h.b16 %v754
          %v921 = vunpack.c.l.b16 %v755
          %v922 = vunpack.c.h.b16 %v755
          %v923 = vunpack.c.l.b16 %v756
          %v924 = vunpack.c.h.b16 %v756
          %v925 = vunpack.c.l.b16 %v757
          %v926 = vunpack.c.h.b16 %v757
          %v927 = vunpack.c.l.b16 %v758
          %v928 = vunpack.c.h.b16 %v758
          %v929 = vunpack.c.l.b16 %v759
          %v930 = vunpack.c.h.b16 %v759
          %v931 = vunpack.c.l.b16 %v760
          %v932 = vunpack.c.h.b16 %v760
          %v933 = vunpack.c.l.b16 %v761
          %v934 = vunpack.c.h.b16 %v761
          %v935 = vunpack.c.l.b16 %v762
          %v936 = vunpack.c.h.b16 %v762
          %v937 = vunpack.c.l.b16 %v763
          %v938 = vunpack.c.h.b16 %v763
          %v939 = vunpack.c.l.b16 %v764
          %v940 = vunpack.c.h.b16 %v764
          %v941 = vunpack.c.l.b16 %v765
          %v942 = vunpack.c.h.b16 %v765
          %v943 = vunpack.c.l.b16 %v766
          %v944 = vunpack.c.h.b16 %v766
          %v945 = vunpack.c.l.b16 %v767
          %v946 = vunpack.c.h.b16 %v767
          %v947 = vunpack.c.l.b16 %v768
          %v948 = vunpack.c.h.b16 %v768
          %v949 = vunpack.c.l.b16 %v769
          %v950 = vunpack.c.h.b16 %v769
          %v951 = vunpack.c.l.b16 %v770
          %v952 = vunpack.c.h.b16 %v770
          %v953 = vunpack.c.l.b16 %v771
          %v954 = vunpack.c.h.b16 %v771
          %v955 = vunpack.c.l.b16 %v772
          %v956 = vunpack.c.h.b16 %v772
          %v957 = vunpack.c.l.b16 %v773
          %v958 = vunpack.c.h.b16 %v773
          %v959 = vunpack.c.l.b16 %v774
          %v960 = vunpack.c.h.b16 %v774
          %v961 = vunpack.c.l.b16 %v775
          %v962 = vunpack.c.h.b16 %v775
          %v963 = vunpack.c.l.b16 %v776
          %v964 = vunpack.c.h.b16 %v776
          %v965 = vunpack.c.l.b16 %v777
          %v966 = vunpack.c.h.b16 %v777
          %v967 = vunpack.c.l.b16 %v778
          %v968 = vunpack.c.h.b16 %v778
          %v969 = vunpack.c.l.b16 %v779
          %v970 = vunpack.c.h.b16 %v779
          %v971 = vunpack.c.l.b16 %v780
          %v972 = vunpack.c.h.b16 %v780
          %v973 = vunpack.c.l.b16 %v781
          %v974 = vunpack.c.h.b16 %v781
          %v975 = vunpack.c.l.b16 %v782
          %v976 = vunpack.c.h.b16 %v782
          %v977 = vunpack.c.l.b16 %v783
          %v978 = vunpack.c.h.b16 %v783
          %v979 = vunpack.c.l.b16 %v784
          %v980 = vunpack.c.h.b16 %v784
          %v981 = vunpack.c.l.b16 %v785
          %v982 = vunpack.c.h.b16 %v785
          %v983 = vunpack.c.l.b16 %v786
          %v984 = vunpack.c.h.b16 %v786
          %v985 = vunpack.c.l.b16 %v787
          %v986 = vunpack.c.h.b16 %v787
          %v987 = vunpack.c.l.b16 %v788
          %v988 = vunpack.c.h.b16 %v788
          %v989 = vunpack.c.l.b16 %v789
          %v990 = vunpack.c.h.b16 %v789
          %v991 = vunpack.c.l.b16 %v790
          %v992 = vunpack.c.h.b16 %v790
          %v993 = vunpack.c.l.b16 %v791
          %v994 = vunpack.c.h.b16 %v791
          %v995 = vunpack.c.l.b16 %v792
          %v996 = vunpack.c.h.b16 %v792
          %v997 = vunpack.c.l.b16 %v793
          %v998 = vunpack.c.h.b16 %v793
          %v999 = vunpack.c.l.b16 %v794
          %v1000 = vunpack.c.h.b16 %v794
          %v1001 = vunpack.c.l.b16 %v795
          %v1002 = vunpack.c.h.b16 %v795
          %v1003 = vunpack.c.l.b16 %v796
          %v1004 = vunpack.c.h.b16 %v796
          %v1005 = vunpack.c.l.b16 %v797
          %v1006 = vunpack.c.h.b16 %v797
          %v1007 = vunpack.c.l.b16 %v798
          %v1008 = vunpack.c.h.b16 %v798
          %v1009 = vpack.c.b16 %v889, %v881
          %v1010 = vpack.c.b16 %v890, %v882
          %v1011 = vpack.c.b16 %v891, %v883
          %v1012 = vpack.c.b16 %v892, %v884
          %v1013 = vpack.c.b16 %v893, %v885
          %v1014 = vpack.c.b16 %v894, %v886
          %v1015 = vpack.c.b16 %v895, %v887
          %v1016 = vpack.c.b16 %v896, %v888
          %v1017 = vpack.c.b16 %v905, %v897
          %v1018 = vpack.c.b16 %v906, %v898
          %v1019 = vpack.c.b16 %v907, %v899
          %v1020 = vpack.c.b16 %v908, %v900
          %v1021 = vpack.c.b16 %v909, %v901
          %v1022 = vpack.c.b16 %v910, %v902
          %v1023 = vpack.c.b16 %v911, %v903
          %v1024 = vpack.c.b16 %v912, %v904
          %v1025 = vpack.c.b16 %v921, %v913
          %v1026 = vpack.c.b16 %v922, %v914
          %v1027 = vpack.c.b16 %v923, %v915
          %v1028 = vpack.c.b16 %v924, %v916
          %v1029 = vpack.c.b16 %v925, %v917
          %v1030 = vpack.c.b16 %v926, %v918
          %v1031 = vpack.c.b16 %v927, %v919
          %v1032 = vpack.c.b16 %v928, %v920
          %v1033 = vpack.c.b16 %v937, %v929
          %v1034 = vpack.c.b16 %v938, %v930
          %v1035 = vpack.c.b16 %v939, %v931
          %v1036 = vpack.c.b16 %v940, %v932
          %v1037 = vpack.c.b16 %v941, %v933
          %v1038 = vpack.c.b16 %v942, %v934
          %v1039 = vpack.c.b16 %v943, %v935
          %v1040 = vpack.c.b16 %v944, %v936
          %v1041 = vpack.c.b16 %v953, %v945
          %v1042 = vpack.c.b16 %v954, %v946
          %v1043 = vpack.c.b16 %v955, %v947
          %v1044 = vpack.c.b16 %v956, %v948
          %v1045 = vpack.c.b16 %v957, %v949
          %v1046 = vpack.c.b16 %v958, %v950
          %v1047 = vpack.c.b16 %v959, %v951
          %v1048 = vpack.c.b16 %v960, %v952
          %v1049 = vpack.c.b16 %v969, %v961
          %v1050 = vpack.c.b16 %v970, %v962
          %v1051 = vpack.c.b16 %v971, %v963
          %v1052 = vpack.c.b16 %v972, %v964
          %v1053 = vpack.c.b16 %v973, %v965
          %v1054 = vpack.c.b16 %v974, %v966
          %v1055 = vpack.c.b16 %v975, %v967
          %v1056 = vpack.c.b16 %v976, %v968
          %v1057 = vpack.c.b16 %v985, %v977
          %v1058 = vpack.c.b16 %v986, %v978
          %v1059 = vpack.c.b16 %v987, %v979
          %v1060 = vpack.c.b16 %v988, %v980
          %v1061 = vpack.c.b16 %v989, %v981
          %v1062 = vpack.c.b16 %v990, %v982
          %v1063 = vpack.c.b16 %v991, %v983
          %v1064 = vpack.c.b16 %v992, %v984
          %v1065 = vpack.c.b16 %v1001, %v993
          %v1066 = vpack.c.b16 %v1002, %v994
          %v1067 = vpack.c.b16 %v1003, %v995
          %v1068 = vpack.c.b16 %v1004, %v996
          %v1069 = vpack.c.b16 %v1005, %v997
          %v1070 = vpack.c.b16 %v1006, %v998
          %v1071 = vpack.c.b16 %v1007, %v999
          %v1072 = vpack.c.b16 %v1008, %v1000
          %1137 = vmatpush.bf16.msra.mxu0 %v1065
          %1138 = vmatpush.bf16.msra.mxu0 %v1057
          %1139 = vmatpush.bf16.msra.mxu0 %v1049
          %1140 = vmatpush.bf16.msra.mxu0 %v1041
          %1141 = vmatpush.bf16.msra.mxu0 %v1033
          %1142 = vmatpush.bf16.msra.mxu0 %v1025
          %1143 = vmatpush.bf16.msra.mxu0 %v1017
          %1144 = vmatpush.bf16.msra.mxu0 %v1009
          %1145 = vmatmul.bf16.gmra.mxu0 %v734
          %v1146 = vpop.f32.mrf.mxu0
          %v1147 = vadd.f32 %v801, %v1146
          %v1148 = vpop.f32.mrf.mxu0
          %1149 = vdwg.mxu0
          %1150 = vmatpush.bf16.msra.mxu0 %v1066
          %1151 = vmatpush.bf16.msra.mxu0 %v1058
          %1152 = vmatpush.bf16.msra.mxu0 %v1050
          %1153 = vmatpush.bf16.msra.mxu0 %v1042
          %1154 = vmatpush.bf16.msra.mxu0 %v1034
          %1155 = vmatpush.bf16.msra.mxu0 %v1026
          %1156 = vmatpush.bf16.msra.mxu0 %v1018
          %1157 = vmatpush.bf16.msra.mxu0 %v1010
          %1158 = vmatmul.bf16.gmra.mxu0 %v734
          %v1159 = vpop.f32.mrf.mxu0
          %v1160 = vadd.f32 %v802, %v1159
          %v1161 = vpop.f32.mrf.mxu0
          %1162 = vdwg.mxu0
          %1163 = vmatpush.bf16.msra.mxu0 %v1067
          %1164 = vmatpush.bf16.msra.mxu0 %v1059
          %1165 = vmatpush.bf16.msra.mxu0 %v1051
          %1166 = vmatpush.bf16.msra.mxu0 %v1043
          %1167 = vmatpush.bf16.msra.mxu0 %v1035
          %1168 = vmatpush.bf16.msra.mxu0 %v1027
          %1169 = vmatpush.bf16.msra.mxu0 %v1019
          %1170 = vmatpush.bf16.msra.mxu0 %v1011
          %1171 = vmatmul.bf16.gmra.mxu0 %v734
          %v1172 = vpop.f32.mrf.mxu0
          %v1173 = vadd.f32 %v803, %v1172
          %v1174 = vpop.f32.mrf.mxu0
          %1175 = vdwg.mxu0
          %1176 = vmatpush.bf16.msra.mxu0 %v1068
          %1177 = vmatpush.bf16.msra.mxu0 %v1060
          %1178 = vmatpush.bf16.msra.mxu0 %v1052
          %1179 = vmatpush.bf16.msra.mxu0 %v1044
          %1180 = vmatpush.bf16.msra.mxu0 %v1036
          %1181 = vmatpush.bf16.msra.mxu0 %v1028
          %1182 = vmatpush.bf16.msra.mxu0 %v1020
          %1183 = vmatpush.bf16.msra.mxu0 %v1012
          %1184 = vmatmul.bf16.gmra.mxu0 %v734
          %v1185 = vpop.f32.mrf.mxu0
          %v1186 = vadd.f32 %v804, %v1185
          %v1187 = vpop.f32.mrf.mxu0
          %1188 = vdwg.mxu0
          %1189 = vmatpush.bf16.msra.mxu0 %v1069
          %1190 = vmatpush.bf16.msra.mxu0 %v1061
          %1191 = vmatpush.bf16.msra.mxu0 %v1053
          %1192 = vmatpush.bf16.msra.mxu0 %v1045
          %1193 = vmatpush.bf16.msra.mxu0 %v1037
          %1194 = vmatpush.bf16.msra.mxu0 %v1029
          %1195 = vmatpush.bf16.msra.mxu0 %v1021
          %1196 = vmatpush.bf16.msra.mxu0 %v1013
          %1197 = vmatmul.bf16.gmra.mxu0 %v734
          %v1198 = vpop.f32.mrf.mxu0
          %v1199 = vadd.f32 %v805, %v1198
          %v1200 = vpop.f32.mrf.mxu0
          %1201 = vdwg.mxu0
          %1202 = vmatpush.bf16.msra.mxu0 %v1070
          %1203 = vmatpush.bf16.msra.mxu0 %v1062
          %1204 = vmatpush.bf16.msra.mxu0 %v1054
          %1205 = vmatpush.bf16.msra.mxu0 %v1046
          %1206 = vmatpush.bf16.msra.mxu0 %v1038
          %1207 = vmatpush.bf16.msra.mxu0 %v1030
          %1208 = vmatpush.bf16.msra.mxu0 %v1022
          %1209 = vmatpush.bf16.msra.mxu0 %v1014
          %1210 = vmatmul.bf16.gmra.mxu0 %v734
          %v1211 = vpop.f32.mrf.mxu0
          %v1212 = vadd.f32 %v806, %v1211
          %v1213 = vpop.f32.mrf.mxu0
          %1214 = vdwg.mxu0
          %1215 = vmatpush.bf16.msra.mxu0 %v1071
          %1216 = vmatpush.bf16.msra.mxu0 %v1063
          %1217 = vmatpush.bf16.msra.mxu0 %v1055
          %1218 = vmatpush.bf16.msra.mxu0 %v1047
          %1219 = vmatpush.bf16.msra.mxu0 %v1039
          %1220 = vmatpush.bf16.msra.mxu0 %v1031
          %1221 = vmatpush.bf16.msra.mxu0 %v1023
          %1222 = vmatpush.bf16.msra.mxu0 %v1015
          %1223 = vmatmul.bf16.gmra.mxu0 %v734
          %v1224 = vpop.f32.mrf.mxu0
          %v1225 = vadd.f32 %v807, %v1224
          %v1226 = vpop.f32.mrf.mxu0
          %1227 = vdwg.mxu0
          %1228 = vmatpush.bf16.msra.mxu0 %v1072
          %1229 = vmatpush.bf16.msra.mxu0 %v1064
          %1230 = vmatpush.bf16.msra.mxu0 %v1056
          %1231 = vmatpush.bf16.msra.mxu0 %v1048
          %1232 = vmatpush.bf16.msra.mxu0 %v1040
          %1233 = vmatpush.bf16.msra.mxu0 %v1032
          %1234 = vmatpush.bf16.msra.mxu0 %v1024
          %1235 = vmatpush.bf16.msra.mxu0 %v1016
          %1236 = vmatmul.bf16.gmra.mxu0 %v734
          %v1237 = vpop.f32.mrf.mxu0
          %v1238 = vadd.f32 %v808, %v1237
          %v1239 = vpop.f32.mrf.mxu0
          %1240 = vdwg.mxu0
          %v1241 = vmax.f32 %v1147, 0.0
          %v1242 = vmax.f32 %v1160, 0.0
          %v1243 = vmax.f32 %v1173, 0.0
          %v1244 = vmax.f32 %v1186, 0.0
          %v1245 = vmax.f32 %v1199, 0.0
          %v1246 = vmax.f32 %v1212, 0.0
          %v1247 = vmax.f32 %v1225, 0.0
          %v1248 = vmax.f32 %v1238, 0.0
          %v1249 = vld [vmem:[#allocation2] sm:$0xff]
          %v1250 = vpack.c.bf16 %v1241, %v1241
          %v1251 = vpack.c.bf16 %v1242, %v1242
          %v1252 = vpack.c.bf16 %v1243, %v1243
          %v1253 = vpack.c.bf16 %v1244, %v1244
          %v1254 = vpack.c.bf16 %v1245, %v1245
          %v1255 = vpack.c.bf16 %v1246, %v1246
          %v1256 = vpack.c.bf16 %v1247, %v1247
          %v1257 = vpack.c.bf16 %v1248, %v1248
          %v1258 = vld [vmem:[%s609] sm:$0xf]
          %v1259 = vld [vmem:[%s609 + $0x4] sm:$0xf]
          %v1260 = vld [vmem:[%s609 + $0x8] sm:$0xf]
          %v1261 = vld [vmem:[%s609 + $0xc] sm:$0xf]
          %v1262 = vld [vmem:[%s609 + $0x10] sm:$0xf]
          %v1263 = vld [vmem:[%s609 + $0x14] sm:$0xf]
          %v1264 = vld [vmem:[%s609 + $0x18] sm:$0xf]
          %v1265 = vld [vmem:[%s609 + $0x1c] sm:$0xf]
          %v1266 = vld [vmem:[%s609 + $0x20] sm:$0xf]
          %v1267 = vld [vmem:[%s609 + $0x24] sm:$0xf]
          %v1268 = vld [vmem:[%s609 + $0x28] sm:$0xf]
          %v1269 = vld [vmem:[%s609 + $0x2c] sm:$0xf]
          %v1270 = vld [vmem:[%s609 + $0x30] sm:$0xf]
          %v1271 = vld [vmem:[%s609 + $0x34] sm:$0xf]
          %v1272 = vld [vmem:[%s609 + $0x38] sm:$0xf]
          %v1273 = vld [vmem:[%s609 + $0x3c] sm:$0xf]
          %v1274 = vld [vmem:[%s609 + $0x40] sm:$0xf]
          %v1275 = vld [vmem:[%s609 + $0x44] sm:$0xf]
          %v1276 = vld [vmem:[%s609 + $0x48] sm:$0xf]
          %v1277 = vld [vmem:[%s609 + $0x4c] sm:$0xf]
          %v1278 = vld [vmem:[%s609 + $0x50] sm:$0xf]
          %v1279 = vld [vmem:[%s609 + $0x54] sm:$0xf]
          %v1280 = vld [vmem:[%s609 + $0x58] sm:$0xf]
          %v1281 = vld [vmem:[%s609 + $0x5c] sm:$0xf]
          %v1282 = vld [vmem:[%s609 + $0x60] sm:$0xf]
          %v1283 = vld [vmem:[%s609 + $0x64] sm:$0xf]
          %v1284 = vld [vmem:[%s609 + $0x68] sm:$0xf]
          %v1285 = vld [vmem:[%s609 + $0x6c] sm:$0xf]
          %v1286 = vld [vmem:[%s609 + $0x70] sm:$0xf]
          %v1287 = vld [vmem:[%s609 + $0x74] sm:$0xf]
          %v1288 = vld [vmem:[%s609 + $0x78] sm:$0xf]
          %v1289 = vld [vmem:[%s609 + $0x7c] sm:$0xf]
          %v1290 = vld [vmem:[%s609 + $0x80] sm:$0xf]
          %v1291 = vld [vmem:[%s609 + $0x84] sm:$0xf]
          %v1292 = vld [vmem:[%s609 + $0x88] sm:$0xf]
          %v1293 = vld [vmem:[%s609 + $0x8c] sm:$0xf]
          %v1294 = vld [vmem:[%s609 + $0x90] sm:$0xf]
          %v1295 = vld [vmem:[%s609 + $0x94] sm:$0xf]
          %v1296 = vld [vmem:[%s609 + $0x98] sm:$0xf]
          %v1297 = vld [vmem:[%s609 + $0x9c] sm:$0xf]
          %v1298 = vld [vmem:[%s609 + $0xa0] sm:$0xf]
          %v1299 = vld [vmem:[%s609 + $0xa4] sm:$0xf]
          %v1300 = vld [vmem:[%s609 + $0xa8] sm:$0xf]
          %v1301 = vld [vmem:[%s609 + $0xac] sm:$0xf]
          %v1302 = vld [vmem:[%s609 + $0xb0] sm:$0xf]
          %v1303 = vld [vmem:[%s609 + $0xb4] sm:$0xf]
          %v1304 = vld [vmem:[%s609 + $0xb8] sm:$0xf]
          %v1305 = vld [vmem:[%s609 + $0xbc] sm:$0xf]
          %v1306 = vld [vmem:[%s609 + $0xc0] sm:$0xf]
          %v1307 = vld [vmem:[%s609 + $0xc4] sm:$0xf]
          %v1308 = vld [vmem:[%s609 + $0xc8] sm:$0xf]
          %v1309 = vld [vmem:[%s609 + $0xcc] sm:$0xf]
          %v1310 = vld [vmem:[%s609 + $0xd0] sm:$0xf]
          %v1311 = vld [vmem:[%s609 + $0xd4] sm:$0xf]
          %v1312 = vld [vmem:[%s609 + $0xd8] sm:$0xf]
          %v1313 = vld [vmem:[%s609 + $0xdc] sm:$0xf]
          %v1314 = vld [vmem:[%s609 + $0xe0] sm:$0xf]
          %v1315 = vld [vmem:[%s609 + $0xe4] sm:$0xf]
          %v1316 = vld [vmem:[%s609 + $0xe8] sm:$0xf]
          %v1317 = vld [vmem:[%s609 + $0xec] sm:$0xf]
          %v1318 = vld [vmem:[%s609 + $0xf0] sm:$0xf]
          %v1319 = vld [vmem:[%s609 + $0xf4] sm:$0xf]
          %v1320 = vld [vmem:[%s609 + $0xf8] sm:$0xf]
          %v1321 = vld [vmem:[%s609 + $0xfc] sm:$0xf]
          %v1322 = vld [vmem:[%s609 + $0x100] sm:$0xf]
          %v1323 = vld [vmem:[%s609 + $0x104] sm:$0xf]
          %v1324 = vld [vmem:[%s609 + $0x108] sm:$0xf]
          %v1325 = vld [vmem:[%s609 + $0x10c] sm:$0xf]
          %v1326 = vld [vmem:[%s609 + $0x110] sm:$0xf]
          %v1327 = vld [vmem:[%s609 + $0x114] sm:$0xf]
          %v1328 = vld [vmem:[%s609 + $0x118] sm:$0xf]
          %v1329 = vld [vmem:[%s609 + $0x11c] sm:$0xf]
          %v1330 = vld [vmem:[%s609 + $0x120] sm:$0xf]
          %v1331 = vld [vmem:[%s609 + $0x124] sm:$0xf]
          %v1332 = vld [vmem:[%s609 + $0x128] sm:$0xf]
          %v1333 = vld [vmem:[%s609 + $0x12c] sm:$0xf]
          %v1334 = vld [vmem:[%s609 + $0x130] sm:$0xf]
          %v1335 = vld [vmem:[%s609 + $0x134] sm:$0xf]
          %v1336 = vld [vmem:[%s609 + $0x138] sm:$0xf]
          %v1337 = vld [vmem:[%s609 + $0x13c] sm:$0xf]
          %v1338 = vld [vmem:[%s609 + $0x140] sm:$0xf]
          %v1339 = vld [vmem:[%s609 + $0x144] sm:$0xf]
          %v1340 = vld [vmem:[%s609 + $0x148] sm:$0xf]
          %v1341 = vld [vmem:[%s609 + $0x14c] sm:$0xf]
          %v1342 = vld [vmem:[%s609 + $0x150] sm:$0xf]
          %v1343 = vld [vmem:[%s609 + $0x154] sm:$0xf]
          %v1344 = vld [vmem:[%s609 + $0x158] sm:$0xf]
          %v1345 = vld [vmem:[%s609 + $0x15c] sm:$0xf]
          %v1346 = vld [vmem:[%s609 + $0x160] sm:$0xf]
          %v1347 = vld [vmem:[%s609 + $0x164] sm:$0xf]
          %v1348 = vld [vmem:[%s609 + $0x168] sm:$0xf]
          %v1349 = vld [vmem:[%s609 + $0x16c] sm:$0xf]
          %v1350 = vld [vmem:[%s609 + $0x170] sm:$0xf]
          %v1351 = vld [vmem:[%s609 + $0x174] sm:$0xf]
          %v1352 = vld [vmem:[%s609 + $0x178] sm:$0xf]
          %v1353 = vld [vmem:[%s609 + $0x17c] sm:$0xf]
          %v1354 = vld [vmem:[%s609 + $0x180] sm:$0xf]
          %v1355 = vld [vmem:[%s609 + $0x184] sm:$0xf]
          %v1356 = vld [vmem:[%s609 + $0x188] sm:$0xf]
          %v1357 = vld [vmem:[%s609 + $0x18c] sm:$0xf]
          %v1358 = vld [vmem:[%s609 + $0x190] sm:$0xf]
          %v1359 = vld [vmem:[%s609 + $0x194] sm:$0xf]
          %v1360 = vld [vmem:[%s609 + $0x198] sm:$0xf]
          %v1361 = vld [vmem:[%s609 + $0x19c] sm:$0xf]
          %v1362 = vld [vmem:[%s609 + $0x1a0] sm:$0xf]
          %v1363 = vld [vmem:[%s609 + $0x1a4] sm:$0xf]
          %v1364 = vld [vmem:[%s609 + $0x1a8] sm:$0xf]
          %v1365 = vld [vmem:[%s609 + $0x1ac] sm:$0xf]
          %v1366 = vld [vmem:[%s609 + $0x1b0] sm:$0xf]
          %v1367 = vld [vmem:[%s609 + $0x1b4] sm:$0xf]
          %v1368 = vld [vmem:[%s609 + $0x1b8] sm:$0xf]
          %v1369 = vld [vmem:[%s609 + $0x1bc] sm:$0xf]
          %v1370 = vld [vmem:[%s609 + $0x1c0] sm:$0xf]
          %v1371 = vld [vmem:[%s609 + $0x1c4] sm:$0xf]
          %v1372 = vld [vmem:[%s609 + $0x1c8] sm:$0xf]
          %v1373 = vld [vmem:[%s609 + $0x1cc] sm:$0xf]
          %v1374 = vld [vmem:[%s609 + $0x1d0] sm:$0xf]
          %v1375 = vld [vmem:[%s609 + $0x1d4] sm:$0xf]
          %v1376 = vld [vmem:[%s609 + $0x1d8] sm:$0xf]
          %v1377 = vld [vmem:[%s609 + $0x1dc] sm:$0xf]
          %v1378 = vld [vmem:[%s609 + $0x1e0] sm:$0xf]
          %v1379 = vld [vmem:[%s609 + $0x1e4] sm:$0xf]
          %v1380 = vld [vmem:[%s609 + $0x1e8] sm:$0xf]
          %v1381 = vld [vmem:[%s609 + $0x1ec] sm:$0xf]
          %v1382 = vld [vmem:[%s609 + $0x1f0] sm:$0xf]
          %v1383 = vld [vmem:[%s609 + $0x1f4] sm:$0xf]
          %v1384 = vld [vmem:[%s609 + $0x1f8] sm:$0xf]
          %v1385 = vld [vmem:[%s609 + $0x1fc] sm:$0xf]
          %v1514 = vunpack.c.l.b16 %v1258
          %v1515 = vunpack.c.l.b16 %v1259
          %v1516 = vunpack.c.l.b16 %v1260
          %v1517 = vunpack.c.l.b16 %v1261
          %v1518 = vunpack.c.l.b16 %v1262
          %v1519 = vunpack.c.l.b16 %v1263
          %v1520 = vunpack.c.l.b16 %v1264
          %v1521 = vunpack.c.l.b16 %v1265
          %v1522 = vunpack.c.l.b16 %v1266
          %v1523 = vunpack.c.l.b16 %v1267
          %v1524 = vunpack.c.l.b16 %v1268
          %v1525 = vunpack.c.l.b16 %v1269
          %v1526 = vunpack.c.l.b16 %v1270
          %v1527 = vunpack.c.l.b16 %v1271
          %v1528 = vunpack.c.l.b16 %v1272
          %v1529 = vunpack.c.l.b16 %v1273
          %v1530 = vunpack.c.l.b16 %v1274
          %v1531 = vunpack.c.l.b16 %v1275
          %v1532 = vunpack.c.l.b16 %v1276
          %v1533 = vunpack.c.l.b16 %v1277
          %v1534 = vunpack.c.l.b16 %v1278
          %v1535 = vunpack.c.l.b16 %v1279
          %v1536 = vunpack.c.l.b16 %v1280
          %v1537 = vunpack.c.l.b16 %v1281
          %v1538 = vunpack.c.l.b16 %v1282
          %v1539 = vunpack.c.l.b16 %v1283
          %v1540 = vunpack.c.l.b16 %v1284
          %v1541 = vunpack.c.l.b16 %v1285
          %v1542 = vunpack.c.l.b16 %v1286
          %v1543 = vunpack.c.l.b16 %v1287
          %v1544 = vunpack.c.l.b16 %v1288
          %v1545 = vunpack.c.l.b16 %v1289
          %v1546 = vunpack.c.l.b16 %v1290
          %v1547 = vunpack.c.l.b16 %v1291
          %v1548 = vunpack.c.l.b16 %v1292
          %v1549 = vunpack.c.l.b16 %v1293
          %v1550 = vunpack.c.l.b16 %v1294
          %v1551 = vunpack.c.l.b16 %v1295
          %v1552 = vunpack.c.l.b16 %v1296
          %v1553 = vunpack.c.l.b16 %v1297
          %v1554 = vunpack.c.l.b16 %v1298
          %v1555 = vunpack.c.l.b16 %v1299
          %v1556 = vunpack.c.l.b16 %v1300
          %v1557 = vunpack.c.l.b16 %v1301
          %v1558 = vunpack.c.l.b16 %v1302
          %v1559 = vunpack.c.l.b16 %v1303
          %v1560 = vunpack.c.l.b16 %v1304
          %v1561 = vunpack.c.l.b16 %v1305
          %v1562 = vunpack.c.l.b16 %v1306
          %v1563 = vunpack.c.l.b16 %v1307
          %v1564 = vunpack.c.l.b16 %v1308
          %v1565 = vunpack.c.l.b16 %v1309
          %v1566 = vunpack.c.l.b16 %v1310
          %v1567 = vunpack.c.l.b16 %v1311
          %v1568 = vunpack.c.l.b16 %v1312
          %v1569 = vunpack.c.l.b16 %v1313
          %v1570 = vunpack.c.l.b16 %v1314
          %v1571 = vunpack.c.l.b16 %v1315
          %v1572 = vunpack.c.l.b16 %v1316
          %v1573 = vunpack.c.l.b16 %v1317
          %v1574 = vunpack.c.l.b16 %v1318
          %v1575 = vunpack.c.l.b16 %v1319
          %v1576 = vunpack.c.l.b16 %v1320
          %v1577 = vunpack.c.l.b16 %v1321
          %v1578 = vunpack.c.l.b16 %v1322
          %v1579 = vunpack.c.l.b16 %v1323
          %v1580 = vunpack.c.l.b16 %v1324
          %v1581 = vunpack.c.l.b16 %v1325
          %v1582 = vunpack.c.l.b16 %v1326
          %v1583 = vunpack.c.l.b16 %v1327
          %v1584 = vunpack.c.l.b16 %v1328
          %v1585 = vunpack.c.l.b16 %v1329
          %v1586 = vunpack.c.l.b16 %v1330
          %v1587 = vunpack.c.l.b16 %v1331
          %v1588 = vunpack.c.l.b16 %v1332
          %v1589 = vunpack.c.l.b16 %v1333
          %v1590 = vunpack.c.l.b16 %v1334
          %v1591 = vunpack.c.l.b16 %v1335
          %v1592 = vunpack.c.l.b16 %v1336
          %v1593 = vunpack.c.l.b16 %v1337
          %v1594 = vunpack.c.l.b16 %v1338
          %v1595 = vunpack.c.l.b16 %v1339
          %v1596 = vunpack.c.l.b16 %v1340
          %v1597 = vunpack.c.l.b16 %v1341
          %v1598 = vunpack.c.l.b16 %v1342
          %v1599 = vunpack.c.l.b16 %v1343
          %v1600 = vunpack.c.l.b16 %v1344
          %v1601 = vunpack.c.l.b16 %v1345
          %v1602 = vunpack.c.l.b16 %v1346
          %v1603 = vunpack.c.l.b16 %v1347
          %v1604 = vunpack.c.l.b16 %v1348
          %v1605 = vunpack.c.l.b16 %v1349
          %v1606 = vunpack.c.l.b16 %v1350
          %v1607 = vunpack.c.l.b16 %v1351
          %v1608 = vunpack.c.l.b16 %v1352
          %v1609 = vunpack.c.l.b16 %v1353
          %v1610 = vunpack.c.l.b16 %v1354
          %v1611 = vunpack.c.l.b16 %v1355
          %v1612 = vunpack.c.l.b16 %v1356
          %v1613 = vunpack.c.l.b16 %v1357
          %v1614 = vunpack.c.l.b16 %v1358
          %v1615 = vunpack.c.l.b16 %v1359
          %v1616 = vunpack.c.l.b16 %v1360
          %v1617 = vunpack.c.l.b16 %v1361
          %v1618 = vunpack.c.l.b16 %v1362
          %v1619 = vunpack.c.l.b16 %v1363
          %v1620 = vunpack.c.l.b16 %v1364
          %v1621 = vunpack.c.l.b16 %v1365
          %v1622 = vunpack.c.l.b16 %v1366
          %v1623 = vunpack.c.l.b16 %v1367
          %v1624 = vunpack.c.l.b16 %v1368
          %v1625 = vunpack.c.l.b16 %v1369
          %v1626 = vunpack.c.l.b16 %v1370
          %v1627 = vunpack.c.l.b16 %v1371
          %v1628 = vunpack.c.l.b16 %v1372
          %v1629 = vunpack.c.l.b16 %v1373
          %v1630 = vunpack.c.l.b16 %v1374
          %v1631 = vunpack.c.l.b16 %v1375
          %v1632 = vunpack.c.l.b16 %v1376
          %v1633 = vunpack.c.l.b16 %v1377
          %v1634 = vunpack.c.l.b16 %v1378
          %v1635 = vunpack.c.l.b16 %v1379
          %v1636 = vunpack.c.l.b16 %v1380
          %v1637 = vunpack.c.l.b16 %v1381
          %v1638 = vunpack.c.l.b16 %v1382
          %v1639 = vunpack.c.l.b16 %v1383
          %v1640 = vunpack.c.l.b16 %v1384
          %v1641 = vunpack.c.l.b16 %v1385
          %v1642 = vpack.c.b16 %v1515, %v1514
          %v1643 = vpack.c.b16 %v1517, %v1516
          %v1644 = vpack.c.b16 %v1519, %v1518
          %v1645 = vpack.c.b16 %v1521, %v1520
          %v1646 = vpack.c.b16 %v1523, %v1522
          %v1647 = vpack.c.b16 %v1525, %v1524
          %v1648 = vpack.c.b16 %v1527, %v1526
          %v1649 = vpack.c.b16 %v1529, %v1528
          %v1650 = vpack.c.b16 %v1531, %v1530
          %v1651 = vpack.c.b16 %v1533, %v1532
          %v1652 = vpack.c.b16 %v1535, %v1534
          %v1653 = vpack.c.b16 %v1537, %v1536
          %v1654 = vpack.c.b16 %v1539, %v1538
          %v1655 = vpack.c.b16 %v1541, %v1540
          %v1656 = vpack.c.b16 %v1543, %v1542
          %v1657 = vpack.c.b16 %v1545, %v1544
          %v1658 = vpack.c.b16 %v1547, %v1546
          %v1659 = vpack.c.b16 %v1549, %v1548
          %v1660 = vpack.c.b16 %v1551, %v1550
          %v1661 = vpack.c.b16 %v1553, %v1552
          %v1662 = vpack.c.b16 %v1555, %v1554
          %v1663 = vpack.c.b16 %v1557, %v1556
          %v1664 = vpack.c.b16 %v1559, %v1558
          %v1665 = vpack.c.b16 %v1561, %v1560
          %v1666 = vpack.c.b16 %v1563, %v1562
          %v1667 = vpack.c.b16 %v1565, %v1564
          %v1668 = vpack.c.b16 %v1567, %v1566
          %v1669 = vpack.c.b16 %v1569, %v1568
          %v1670 = vpack.c.b16 %v1571, %v1570
          %v1671 = vpack.c.b16 %v1573, %v1572
          %v1672 = vpack.c.b16 %v1575, %v1574
          %v1673 = vpack.c.b16 %v1577, %v1576
          %v1674 = vpack.c.b16 %v1579, %v1578
          %v1675 = vpack.c.b16 %v1581, %v1580
          %v1676 = vpack.c.b16 %v1583, %v1582
          %v1677 = vpack.c.b16 %v1585, %v1584
          %v1678 = vpack.c.b16 %v1587, %v1586
          %v1679 = vpack.c.b16 %v1589, %v1588
          %v1680 = vpack.c.b16 %v1591, %v1590
          %v1681 = vpack.c.b16 %v1593, %v1592
          %v1682 = vpack.c.b16 %v1595, %v1594
          %v1683 = vpack.c.b16 %v1597, %v1596
          %v1684 = vpack.c.b16 %v1599, %v1598
          %v1685 = vpack.c.b16 %v1601, %v1600
          %v1686 = vpack.c.b16 %v1603, %v1602
          %v1687 = vpack.c.b16 %v1605, %v1604
          %v1688 = vpack.c.b16 %v1607, %v1606
          %v1689 = vpack.c.b16 %v1609, %v1608
          %v1690 = vpack.c.b16 %v1611, %v1610
          %v1691 = vpack.c.b16 %v1613, %v1612
          %v1692 = vpack.c.b16 %v1615, %v1614
          %v1693 = vpack.c.b16 %v1617, %v1616
          %v1694 = vpack.c.b16 %v1619, %v1618
          %v1695 = vpack.c.b16 %v1621, %v1620
          %v1696 = vpack.c.b16 %v1623, %v1622
          %v1697 = vpack.c.b16 %v1625, %v1624
          %v1698 = vpack.c.b16 %v1627, %v1626
          %v1699 = vpack.c.b16 %v1629, %v1628
          %v1700 = vpack.c.b16 %v1631, %v1630
          %v1701 = vpack.c.b16 %v1633, %v1632
          %v1702 = vpack.c.b16 %v1635, %v1634
          %v1703 = vpack.c.b16 %v1637, %v1636
          %v1704 = vpack.c.b16 %v1639, %v1638
          %v1705 = vpack.c.b16 %v1641, %v1640
          %1770 = vmatpush.bf16.msra.mxu0 %v1649
          %1771 = vmatpush.bf16.msra.mxu0 %v1648
          %1772 = vmatpush.bf16.msra.mxu0 %v1647
          %1773 = vmatpush.bf16.msra.mxu0 %v1646
          %1774 = vmatpush.bf16.msra.mxu0 %v1645
          %1775 = vmatpush.bf16.msra.mxu0 %v1644
          %1776 = vmatpush.bf16.msra.mxu0 %v1643
          %1777 = vmatpush.bf16.msra.mxu0 %v1642
          %1778 = vmatmul.bf16.gmra.mxu0 %v1250
          %v1779 = vpop.f32.mrf.mxu0
          %v1780 = vadd.f32 0.0, %v1779
          %v1781 = vpop.f32.mrf.mxu0
          %1782 = vdwg.mxu0
          %1783 = vmatpush.bf16.msra.mxu0 %v1657
          %1784 = vmatpush.bf16.msra.mxu0 %v1656
          %1785 = vmatpush.bf16.msra.mxu0 %v1655
          %1786 = vmatpush.bf16.msra.mxu0 %v1654
          %1787 = vmatpush.bf16.msra.mxu0 %v1653
          %1788 = vmatpush.bf16.msra.mxu0 %v1652
          %1789 = vmatpush.bf16.msra.mxu0 %v1651
          %1790 = vmatpush.bf16.msra.mxu0 %v1650
          %1791 = vmatmul.bf16.gmra.mxu0 %v1251
          %v1792 = vpop.f32.mrf.mxu0
          %v1793 = vadd.f32 %v1780, %v1792
          %v1794 = vpop.f32.mrf.mxu0
          %1795 = vdwg.mxu0
          %1796 = vmatpush.bf16.msra.mxu0 %v1665
          %1797 = vmatpush.bf16.msra.mxu0 %v1664
          %1798 = vmatpush.bf16.msra.mxu0 %v1663
          %1799 = vmatpush.bf16.msra.mxu0 %v1662
          %1800 = vmatpush.bf16.msra.mxu0 %v1661
          %1801 = vmatpush.bf16.msra.mxu0 %v1660
          %1802 = vmatpush.bf16.msra.mxu0 %v1659
          %1803 = vmatpush.bf16.msra.mxu0 %v1658
          %1804 = vmatmul.bf16.gmra.mxu0 %v1252
          %v1805 = vpop.f32.mrf.mxu0
          %v1806 = vadd.f32 %v1793, %v1805
          %v1807 = vpop.f32.mrf.mxu0
          %1808 = vdwg.mxu0
          %1809 = vmatpush.bf16.msra.mxu0 %v1673
          %1810 = vmatpush.bf16.msra.mxu0 %v1672
          %1811 = vmatpush.bf16.msra.mxu0 %v1671
          %1812 = vmatpush.bf16.msra.mxu0 %v1670
          %1813 = vmatpush.bf16.msra.mxu0 %v1669
          %1814 = vmatpush.bf16.msra.mxu0 %v1668
          %1815 = vmatpush.bf16.msra.mxu0 %v1667
          %1816 = vmatpush.bf16.msra.mxu0 %v1666
          %1817 = vmatmul.bf16.gmra.mxu0 %v1253
          %v1818 = vpop.f32.mrf.mxu0
          %v1819 = vadd.f32 %v1806, %v1818
          %v1820 = vpop.f32.mrf.mxu0
          %1821 = vdwg.mxu0
          %1822 = vmatpush.bf16.msra.mxu0 %v1681
          %1823 = vmatpush.bf16.msra.mxu0 %v1680
          %1824 = vmatpush.bf16.msra.mxu0 %v1679
          %1825 = vmatpush.bf16.msra.mxu0 %v1678
          %1826 = vmatpush.bf16.msra.mxu0 %v1677
          %1827 = vmatpush.bf16.msra.mxu0 %v1676
          %1828 = vmatpush.bf16.msra.mxu0 %v1675
          %1829 = vmatpush.bf16.msra.mxu0 %v1674
          %1830 = vmatmul.bf16.gmra.mxu0 %v1254
          %v1831 = vpop.f32.mrf.mxu0
          %v1832 = vadd.f32 %v1819, %v1831
          %v1833 = vpop.f32.mrf.mxu0
          %1834 = vdwg.mxu0
          %1835 = vmatpush.bf16.msra.mxu0 %v1689
          %1836 = vmatpush.bf16.msra.mxu0 %v1688
          %1837 = vmatpush.bf16.msra.mxu0 %v1687
          %1838 = vmatpush.bf16.msra.mxu0 %v1686
          %1839 = vmatpush.bf16.msra.mxu0 %v1685
          %1840 = vmatpush.bf16.msra.mxu0 %v1684
          %1841 = vmatpush.bf16.msra.mxu0 %v1683
          %1842 = vmatpush.bf16.msra.mxu0 %v1682
          %1843 = vmatmul.bf16.gmra.mxu0 %v1255
          %v1844 = vpop.f32.mrf.mxu0
          %v1845 = vadd.f32 %v1832, %v1844
          %v1846 = vpop.f32.mrf.mxu0
          %1847 = vdwg.mxu0
          %1848 = vmatpush.bf16.msra.mxu0 %v1697
          %1849 = vmatpush.bf16.msra.mxu0 %v1696
          %1850 = vmatpush.bf16.msra.mxu0 %v1695
          %1851 = vmatpush.bf16.msra.mxu0 %v1694
          %1852 = vmatpush.bf16.msra.mxu0 %v1693
          %1853 = vmatpush.bf16.msra.mxu0 %v1692
          %1854 = vmatpush.bf16.msra.mxu0 %v1691
          %1855 = vmatpush.bf16.msra.mxu0 %v1690
          %1856 = vmatmul.bf16.gmra.mxu0 %v1256
          %v1857 = vpop.f32.mrf.mxu0
          %v1858 = vadd.f32 %v1845, %v1857
          %v1859 = vpop.f32.mrf.mxu0
          %1860 = vdwg.mxu0
          %1861 = vmatpush.bf16.msra.mxu0 %v1705
          %1862 = vmatpush.bf16.msra.mxu0 %v1704
          %1863 = vmatpush.bf16.msra.mxu0 %v1703
          %1864 = vmatpush.bf16.msra.mxu0 %v1702
          %1865 = vmatpush.bf16.msra.mxu0 %v1701
          %1866 = vmatpush.bf16.msra.mxu0 %v1700
          %1867 = vmatpush.bf16.msra.mxu0 %v1699
          %1868 = vmatpush.bf16.msra.mxu0 %v1698
          %1869 = vmatmul.bf16.gmra.mxu0 %v1257
          %v1870 = vpop.f32.mrf.mxu0
          %v1871 = vadd.f32 %v1858, %v1870
          %v1872 = vpop.f32.mrf.mxu0
          %1873 = vdwg.mxu0
          %v1874 = vadd.f32 %v1249, %v1871
          %1875 = vst [vmem:[#allocation2] sm:$0xff] %v1874
        $region104: #{network_forward.1} parent=71 // pred_fallthru
          _
        %p1876 = scmp.eq.s32.totalorder %s41, 3
        %p1877 = pnand %p729, %p1876
        %p1878 = pneg %p1877
        // Predicated region
        $region105: #{network_forward.1} parent=71 // pred_check
          _
        $region106: #{network_forward.1} parent=71 // pred_check_branch
          %1880 = sbr.rel (%p1877) target = $region108
        $region107: #{network_forward.1} parent=71 // pred_region
          %v1881 = vld [vmem:[#allocation2] sm:$0xff]
          %v1882 = vld [vmem:[%s4] sm:$0x1]
          %v1884 = vperm.slane %v1882, 0
          %v1886 = vadd.f32 %v1881, %v1884
          %v1887 = vsub.f32 0.0, %v1886
          %v1888 = vmul.f32 %v1887, 1.442695
          %v1889 = vpow.pop %v1888
          %v1890 = vadd.f32 %v1889, 1.0
          %v1891 = vrcp.pop %v1890
          %v1892 = vmul.f32 %v1886, %v1891
          %1893 = vst [vmem:[#allocation3] sm:$0xff] %v1892
        $region108: #{network_forward.1} parent=71 // pred_fallthru
          _
        %p1894 = scmp.eq.s32.totalorder %s40, 1
        // Predicated region
        $region109: #{network_forward.1} parent=71 // pred_check
          %p1895 = pneg %p1894
        $region110: #{network_forward.1} parent=71 // pred_check_branch
          %1897 = sbr.rel (%p1895) target = $region112
        $region111: #{network_forward.1} parent=71 // pred_region
          %v1898 = vld [vmem:[#allocation3] sm:$0xff]
          %v1899 = vpack.c.bf16 %v1898, %v1898
          %v1900 = vld [vmem:[%s619] sm:$0xff]
          %v1901 = vld [vmem:[%s619 + $0x8] sm:$0xff]
          %v1902 = vld [vmem:[%s619 + $0x10] sm:$0xff]
          %v1903 = vld [vmem:[%s619 + $0x18] sm:$0xff]
          %v1904 = vld [vmem:[%s619 + $0x20] sm:$0xff]
          %v1905 = vld [vmem:[%s619 + $0x28] sm:$0xff]
          %v1906 = vld [vmem:[%s619 + $0x30] sm:$0xff]
          %v1907 = vld [vmem:[%s619 + $0x38] sm:$0xff]
          %v1908 = vld [vmem:[%s619 + $0x40] sm:$0xff]
          %v1909 = vld [vmem:[%s619 + $0x48] sm:$0xff]
          %v1910 = vld [vmem:[%s619 + $0x50] sm:$0xff]
          %v1911 = vld [vmem:[%s619 + $0x58] sm:$0xff]
          %v1912 = vld [vmem:[%s619 + $0x60] sm:$0xff]
          %v1913 = vld [vmem:[%s619 + $0x68] sm:$0xff]
          %v1914 = vld [vmem:[%s619 + $0x70] sm:$0xff]
          %v1915 = vld [vmem:[%s619 + $0x78] sm:$0xff]
          %v1916 = vld [vmem:[%s619 + $0x80] sm:$0xff]
          %v1917 = vld [vmem:[%s619 + $0x88] sm:$0xff]
          %v1918 = vld [vmem:[%s619 + $0x90] sm:$0xff]
          %v1919 = vld [vmem:[%s619 + $0x98] sm:$0xff]
          %v1920 = vld [vmem:[%s619 + $0xa0] sm:$0xff]
          %v1921 = vld [vmem:[%s619 + $0xa8] sm:$0xff]
          %v1922 = vld [vmem:[%s619 + $0xb0] sm:$0xff]
          %v1923 = vld [vmem:[%s619 + $0xb8] sm:$0xff]
          %v1924 = vld [vmem:[%s619 + $0xc0] sm:$0xff]
          %v1925 = vld [vmem:[%s619 + $0xc8] sm:$0xff]
          %v1926 = vld [vmem:[%s619 + $0xd0] sm:$0xff]
          %v1927 = vld [vmem:[%s619 + $0xd8] sm:$0xff]
          %v1928 = vld [vmem:[%s619 + $0xe0] sm:$0xff]
          %v1929 = vld [vmem:[%s619 + $0xe8] sm:$0xff]
          %v1930 = vld [vmem:[%s619 + $0xf0] sm:$0xff]
          %v1931 = vld [vmem:[%s619 + $0xf8] sm:$0xff]
          %v1932 = vld [vmem:[%s619 + $0x100] sm:$0xff]
          %v1933 = vld [vmem:[%s619 + $0x108] sm:$0xff]
          %v1934 = vld [vmem:[%s619 + $0x110] sm:$0xff]
          %v1935 = vld [vmem:[%s619 + $0x118] sm:$0xff]
          %v1936 = vld [vmem:[%s619 + $0x120] sm:$0xff]
          %v1937 = vld [vmem:[%s619 + $0x128] sm:$0xff]
          %v1938 = vld [vmem:[%s619 + $0x130] sm:$0xff]
          %v1939 = vld [vmem:[%s619 + $0x138] sm:$0xff]
          %v1940 = vld [vmem:[%s619 + $0x140] sm:$0xff]
          %v1941 = vld [vmem:[%s619 + $0x148] sm:$0xff]
          %v1942 = vld [vmem:[%s619 + $0x150] sm:$0xff]
          %v1943 = vld [vmem:[%s619 + $0x158] sm:$0xff]
          %v1944 = vld [vmem:[%s619 + $0x160] sm:$0xff]
          %v1945 = vld [vmem:[%s619 + $0x168] sm:$0xff]
          %v1946 = vld [vmem:[%s619 + $0x170] sm:$0xff]
          %v1947 = vld [vmem:[%s619 + $0x178] sm:$0xff]
          %v1948 = vld [vmem:[%s619 + $0x180] sm:$0xff]
          %v1949 = vld [vmem:[%s619 + $0x188] sm:$0xff]
          %v1950 = vld [vmem:[%s619 + $0x190] sm:$0xff]
          %v1951 = vld [vmem:[%s619 + $0x198] sm:$0xff]
          %v1952 = vld [vmem:[%s619 + $0x1a0] sm:$0xff]
          %v1953 = vld [vmem:[%s619 + $0x1a8] sm:$0xff]
          %v1954 = vld [vmem:[%s619 + $0x1b0] sm:$0xff]
          %v1955 = vld [vmem:[%s619 + $0x1b8] sm:$0xff]
          %v1956 = vld [vmem:[%s619 + $0x1c0] sm:$0xff]
          %v1957 = vld [vmem:[%s619 + $0x1c8] sm:$0xff]
          %v1958 = vld [vmem:[%s619 + $0x1d0] sm:$0xff]
          %v1959 = vld [vmem:[%s619 + $0x1d8] sm:$0xff]
          %v1960 = vld [vmem:[%s619 + $0x1e0] sm:$0xff]
          %v1961 = vld [vmem:[%s619 + $0x1e8] sm:$0xff]
          %v1962 = vld [vmem:[%s619 + $0x1f0] sm:$0xff]
          %v1963 = vld [vmem:[%s619 + $0x1f8] sm:$0xff]
          %v1964 = vld [vmem:[%s629] sm:$0xff]
          %v1966 = vperm.slane %v1964, 0
          %v1967 = vperm.slane %v1964, 1
          %v1968 = vperm.slane %v1964, 2
          %v1969 = vperm.slane %v1964, 3
          %v1970 = vperm.slane %v1964, 4
          %v1971 = vperm.slane %v1964, 5
          %v1972 = vperm.slane %v1964, 6
          %v1973 = vperm.slane %v1964, 7
          %v2046 = vunpack.c.l.b16 %v1900
          %v2047 = vunpack.c.h.b16 %v1900
          %v2048 = vunpack.c.l.b16 %v1901
          %v2049 = vunpack.c.h.b16 %v1901
          %v2050 = vunpack.c.l.b16 %v1902
          %v2051 = vunpack.c.h.b16 %v1902
          %v2052 = vunpack.c.l.b16 %v1903
          %v2053 = vunpack.c.h.b16 %v1903
          %v2054 = vunpack.c.l.b16 %v1904
          %v2055 = vunpack.c.h.b16 %v1904
          %v2056 = vunpack.c.l.b16 %v1905
          %v2057 = vunpack.c.h.b16 %v1905
          %v2058 = vunpack.c.l.b16 %v1906
          %v2059 = vunpack.c.h.b16 %v1906
          %v2060 = vunpack.c.l.b16 %v1907
          %v2061 = vunpack.c.h.b16 %v1907
          %v2062 = vunpack.c.l.b16 %v1908
          %v2063 = vunpack.c.h.b16 %v1908
          %v2064 = vunpack.c.l.b16 %v1909
          %v2065 = vunpack.c.h.b16 %v1909
          %v2066 = vunpack.c.l.b16 %v1910
          %v2067 = vunpack.c.h.b16 %v1910
          %v2068 = vunpack.c.l.b16 %v1911
          %v2069 = vunpack.c.h.b16 %v1911
          %v2070 = vunpack.c.l.b16 %v1912
          %v2071 = vunpack.c.h.b16 %v1912
          %v2072 = vunpack.c.l.b16 %v1913
          %v2073 = vunpack.c.h.b16 %v1913
          %v2074 = vunpack.c.l.b16 %v1914
          %v2075 = vunpack.c.h.b16 %v1914
          %v2076 = vunpack.c.l.b16 %v1915
          %v2077 = vunpack.c.h.b16 %v1915
          %v2078 = vunpack.c.l.b16 %v1916
          %v2079 = vunpack.c.h.b16 %v1916
          %v2080 = vunpack.c.l.b16 %v1917
          %v2081 = vunpack.c.h.b16 %v1917
          %v2082 = vunpack.c.l.b16 %v1918
          %v2083 = vunpack.c.h.b16 %v1918
          %v2084 = vunpack.c.l.b16 %v1919
          %v2085 = vunpack.c.h.b16 %v1919
          %v2086 = vunpack.c.l.b16 %v1920
          %v2087 = vunpack.c.h.b16 %v1920
          %v2088 = vunpack.c.l.b16 %v1921
          %v2089 = vunpack.c.h.b16 %v1921
          %v2090 = vunpack.c.l.b16 %v1922
          %v2091 = vunpack.c.h.b16 %v1922
          %v2092 = vunpack.c.l.b16 %v1923
          %v2093 = vunpack.c.h.b16 %v1923
          %v2094 = vunpack.c.l.b16 %v1924
          %v2095 = vunpack.c.h.b16 %v1924
          %v2096 = vunpack.c.l.b16 %v1925
          %v2097 = vunpack.c.h.b16 %v1925
          %v2098 = vunpack.c.l.b16 %v1926
          %v2099 = vunpack.c.h.b16 %v1926
          %v2100 = vunpack.c.l.b16 %v1927
          %v2101 = vunpack.c.h.b16 %v1927
          %v2102 = vunpack.c.l.b16 %v1928
          %v2103 = vunpack.c.h.b16 %v1928
          %v2104 = vunpack.c.l.b16 %v1929
          %v2105 = vunpack.c.h.b16 %v1929
          %v2106 = vunpack.c.l.b16 %v1930
          %v2107 = vunpack.c.h.b16 %v1930
          %v2108 = vunpack.c.l.b16 %v1931
          %v2109 = vunpack.c.h.b16 %v1931
          %v2110 = vunpack.c.l.b16 %v1932
          %v2111 = vunpack.c.h.b16 %v1932
          %v2112 = vunpack.c.l.b16 %v1933
          %v2113 = vunpack.c.h.b16 %v1933
          %v2114 = vunpack.c.l.b16 %v1934
          %v2115 = vunpack.c.h.b16 %v1934
          %v2116 = vunpack.c.l.b16 %v1935
          %v2117 = vunpack.c.h.b16 %v1935
          %v2118 = vunpack.c.l.b16 %v1936
          %v2119 = vunpack.c.h.b16 %v1936
          %v2120 = vunpack.c.l.b16 %v1937
          %v2121 = vunpack.c.h.b16 %v1937
          %v2122 = vunpack.c.l.b16 %v1938
          %v2123 = vunpack.c.h.b16 %v1938
          %v2124 = vunpack.c.l.b16 %v1939
          %v2125 = vunpack.c.h.b16 %v1939
          %v2126 = vunpack.c.l.b16 %v1940
          %v2127 = vunpack.c.h.b16 %v1940
          %v2128 = vunpack.c.l.b16 %v1941
          %v2129 = vunpack.c.h.b16 %v1941
          %v2130 = vunpack.c.l.b16 %v1942
          %v2131 = vunpack.c.h.b16 %v1942
          %v2132 = vunpack.c.l.b16 %v1943
          %v2133 = vunpack.c.h.b16 %v1943
          %v2134 = vunpack.c.l.b16 %v1944
          %v2135 = vunpack.c.h.b16 %v1944
          %v2136 = vunpack.c.l.b16 %v1945
          %v2137 = vunpack.c.h.b16 %v1945
          %v2138 = vunpack.c.l.b16 %v1946
          %v2139 = vunpack.c.h.b16 %v1946
          %v2140 = vunpack.c.l.b16 %v1947
          %v2141 = vunpack.c.h.b16 %v1947
          %v2142 = vunpack.c.l.b16 %v1948
          %v2143 = vunpack.c.h.b16 %v1948
          %v2144 = vunpack.c.l.b16 %v1949
          %v2145 = vunpack.c.h.b16 %v1949
          %v2146 = vunpack.c.l.b16 %v1950
          %v2147 = vunpack.c.h.b16 %v1950
          %v2148 = vunpack.c.l.b16 %v1951
          %v2149 = vunpack.c.h.b16 %v1951
          %v2150 = vunpack.c.l.b16 %v1952
          %v2151 = vunpack.c.h.b16 %v1952
          %v2152 = vunpack.c.l.b16 %v1953
          %v2153 = vunpack.c.h.b16 %v1953
          %v2154 = vunpack.c.l.b16 %v1954
          %v2155 = vunpack.c.h.b16 %v1954
          %v2156 = vunpack.c.l.b16 %v1955
          %v2157 = vunpack.c.h.b16 %v1955
          %v2158 = vunpack.c.l.b16 %v1956
          %v2159 = vunpack.c.h.b16 %v1956
          %v2160 = vunpack.c.l.b16 %v1957
          %v2161 = vunpack.c.h.b16 %v1957
          %v2162 = vunpack.c.l.b16 %v1958
          %v2163 = vunpack.c.h.b16 %v1958
          %v2164 = vunpack.c.l.b16 %v1959
          %v2165 = vunpack.c.h.b16 %v1959
          %v2166 = vunpack.c.l.b16 %v1960
          %v2167 = vunpack.c.h.b16 %v1960
          %v2168 = vunpack.c.l.b16 %v1961
          %v2169 = vunpack.c.h.b16 %v1961
          %v2170 = vunpack.c.l.b16 %v1962
          %v2171 = vunpack.c.h.b16 %v1962
          %v2172 = vunpack.c.l.b16 %v1963
          %v2173 = vunpack.c.h.b16 %v1963
          %v2174 = vpack.c.b16 %v2054, %v2046
          %v2175 = vpack.c.b16 %v2055, %v2047
          %v2176 = vpack.c.b16 %v2056, %v2048
          %v2177 = vpack.c.b16 %v2057, %v2049
          %v2178 = vpack.c.b16 %v2058, %v2050
          %v2179 = vpack.c.b16 %v2059, %v2051
          %v2180 = vpack.c.b16 %v2060, %v2052
          %v2181 = vpack.c.b16 %v2061, %v2053
          %v2182 = vpack.c.b16 %v2070, %v2062
          %v2183 = vpack.c.b16 %v2071, %v2063
          %v2184 = vpack.c.b16 %v2072, %v2064
          %v2185 = vpack.c.b16 %v2073, %v2065
          %v2186 = vpack.c.b16 %v2074, %v2066
          %v2187 = vpack.c.b16 %v2075, %v2067
          %v2188 = vpack.c.b16 %v2076, %v2068
          %v2189 = vpack.c.b16 %v2077, %v2069
          %v2190 = vpack.c.b16 %v2086, %v2078
          %v2191 = vpack.c.b16 %v2087, %v2079
          %v2192 = vpack.c.b16 %v2088, %v2080
          %v2193 = vpack.c.b16 %v2089, %v2081
          %v2194 = vpack.c.b16 %v2090, %v2082
          %v2195 = vpack.c.b16 %v2091, %v2083
          %v2196 = vpack.c.b16 %v2092, %v2084
          %v2197 = vpack.c.b16 %v2093, %v2085
          %v2198 = vpack.c.b16 %v2102, %v2094
          %v2199 = vpack.c.b16 %v2103, %v2095
          %v2200 = vpack.c.b16 %v2104, %v2096
          %v2201 = vpack.c.b16 %v2105, %v2097
          %v2202 = vpack.c.b16 %v2106, %v2098
          %v2203 = vpack.c.b16 %v2107, %v2099
          %v2204 = vpack.c.b16 %v2108, %v2100
          %v2205 = vpack.c.b16 %v2109, %v2101
          %v2206 = vpack.c.b16 %v2118, %v2110
          %v2207 = vpack.c.b16 %v2119, %v2111
          %v2208 = vpack.c.b16 %v2120, %v2112
          %v2209 = vpack.c.b16 %v2121, %v2113
          %v2210 = vpack.c.b16 %v2122, %v2114
          %v2211 = vpack.c.b16 %v2123, %v2115
          %v2212 = vpack.c.b16 %v2124, %v2116
          %v2213 = vpack.c.b16 %v2125, %v2117
          %v2214 = vpack.c.b16 %v2134, %v2126
          %v2215 = vpack.c.b16 %v2135, %v2127
          %v2216 = vpack.c.b16 %v2136, %v2128
          %v2217 = vpack.c.b16 %v2137, %v2129
          %v2218 = vpack.c.b16 %v2138, %v2130
          %v2219 = vpack.c.b16 %v2139, %v2131
          %v2220 = vpack.c.b16 %v2140, %v2132
          %v2221 = vpack.c.b16 %v2141, %v2133
          %v2222 = vpack.c.b16 %v2150, %v2142
          %v2223 = vpack.c.b16 %v2151, %v2143
          %v2224 = vpack.c.b16 %v2152, %v2144
          %v2225 = vpack.c.b16 %v2153, %v2145
          %v2226 = vpack.c.b16 %v2154, %v2146
          %v2227 = vpack.c.b16 %v2155, %v2147
          %v2228 = vpack.c.b16 %v2156, %v2148
          %v2229 = vpack.c.b16 %v2157, %v2149
          %v2230 = vpack.c.b16 %v2166, %v2158
          %v2231 = vpack.c.b16 %v2167, %v2159
          %v2232 = vpack.c.b16 %v2168, %v2160
          %v2233 = vpack.c.b16 %v2169, %v2161
          %v2234 = vpack.c.b16 %v2170, %v2162
          %v2235 = vpack.c.b16 %v2171, %v2163
          %v2236 = vpack.c.b16 %v2172, %v2164
          %v2237 = vpack.c.b16 %v2173, %v2165
          %2302 = vmatpush.bf16.msra.mxu0 %v2230
          %2303 = vmatpush.bf16.msra.mxu0 %v2222
          %2304 = vmatpush.bf16.msra.mxu0 %v2214
          %2305 = vmatpush.bf16.msra.mxu0 %v2206
          %2306 = vmatpush.bf16.msra.mxu0 %v2198
          %2307 = vmatpush.bf16.msra.mxu0 %v2190
          %2308 = vmatpush.bf16.msra.mxu0 %v2182
          %2309 = vmatpush.bf16.msra.mxu0 %v2174
          %2310 = vmatmul.bf16.gmra.mxu0 %v1899
          %v2311 = vpop.f32.mrf.mxu0
          %v2312 = vadd.f32 %v1966, %v2311
          %v2313 = vpop.f32.mrf.mxu0
          %2314 = vdwg.mxu0
          %2315 = vmatpush.bf16.msra.mxu0 %v2231
          %2316 = vmatpush.bf16.msra.mxu0 %v2223
          %2317 = vmatpush.bf16.msra.mxu0 %v2215
          %2318 = vmatpush.bf16.msra.mxu0 %v2207
          %2319 = vmatpush.bf16.msra.mxu0 %v2199
          %2320 = vmatpush.bf16.msra.mxu0 %v2191
          %2321 = vmatpush.bf16.msra.mxu0 %v2183
          %2322 = vmatpush.bf16.msra.mxu0 %v2175
          %2323 = vmatmul.bf16.gmra.mxu0 %v1899
          %v2324 = vpop.f32.mrf.mxu0
          %v2325 = vadd.f32 %v1967, %v2324
          %v2326 = vpop.f32.mrf.mxu0
          %2327 = vdwg.mxu0
          %2328 = vmatpush.bf16.msra.mxu0 %v2232
          %2329 = vmatpush.bf16.msra.mxu0 %v2224
          %2330 = vmatpush.bf16.msra.mxu0 %v2216
          %2331 = vmatpush.bf16.msra.mxu0 %v2208
          %2332 = vmatpush.bf16.msra.mxu0 %v2200
          %2333 = vmatpush.bf16.msra.mxu0 %v2192
          %2334 = vmatpush.bf16.msra.mxu0 %v2184
          %2335 = vmatpush.bf16.msra.mxu0 %v2176
          %2336 = vmatmul.bf16.gmra.mxu0 %v1899
          %v2337 = vpop.f32.mrf.mxu0
          %v2338 = vadd.f32 %v1968, %v2337
          %v2339 = vpop.f32.mrf.mxu0
          %2340 = vdwg.mxu0
          %2341 = vmatpush.bf16.msra.mxu0 %v2233
          %2342 = vmatpush.bf16.msra.mxu0 %v2225
          %2343 = vmatpush.bf16.msra.mxu0 %v2217
          %2344 = vmatpush.bf16.msra.mxu0 %v2209
          %2345 = vmatpush.bf16.msra.mxu0 %v2201
          %2346 = vmatpush.bf16.msra.mxu0 %v2193
          %2347 = vmatpush.bf16.msra.mxu0 %v2185
          %2348 = vmatpush.bf16.msra.mxu0 %v2177
          %2349 = vmatmul.bf16.gmra.mxu0 %v1899
          %v2350 = vpop.f32.mrf.mxu0
          %v2351 = vadd.f32 %v1969, %v2350
          %v2352 = vpop.f32.mrf.mxu0
          %2353 = vdwg.mxu0
          %2354 = vmatpush.bf16.msra.mxu0 %v2234
          %2355 = vmatpush.bf16.msra.mxu0 %v2226
          %2356 = vmatpush.bf16.msra.mxu0 %v2218
          %2357 = vmatpush.bf16.msra.mxu0 %v2210
          %2358 = vmatpush.bf16.msra.mxu0 %v2202
          %2359 = vmatpush.bf16.msra.mxu0 %v2194
          %2360 = vmatpush.bf16.msra.mxu0 %v2186
          %2361 = vmatpush.bf16.msra.mxu0 %v2178
          %2362 = vmatmul.bf16.gmra.mxu0 %v1899
          %v2363 = vpop.f32.mrf.mxu0
          %v2364 = vadd.f32 %v1970, %v2363
          %v2365 = vpop.f32.mrf.mxu0
          %2366 = vdwg.mxu0
          %2367 = vmatpush.bf16.msra.mxu0 %v2235
          %2368 = vmatpush.bf16.msra.mxu0 %v2227
          %2369 = vmatpush.bf16.msra.mxu0 %v2219
          %2370 = vmatpush.bf16.msra.mxu0 %v2211
          %2371 = vmatpush.bf16.msra.mxu0 %v2203
          %2372 = vmatpush.bf16.msra.mxu0 %v2195
          %2373 = vmatpush.bf16.msra.mxu0 %v2187
          %2374 = vmatpush.bf16.msra.mxu0 %v2179
          %2375 = vmatmul.bf16.gmra.mxu0 %v1899
          %v2376 = vpop.f32.mrf.mxu0
          %v2377 = vadd.f32 %v1971, %v2376
          %v2378 = vpop.f32.mrf.mxu0
          %2379 = vdwg.mxu0
          %2380 = vmatpush.bf16.msra.mxu0 %v2236
          %2381 = vmatpush.bf16.msra.mxu0 %v2228
          %2382 = vmatpush.bf16.msra.mxu0 %v2220
          %2383 = vmatpush.bf16.msra.mxu0 %v2212
          %2384 = vmatpush.bf16.msra.mxu0 %v2204
          %2385 = vmatpush.bf16.msra.mxu0 %v2196
          %2386 = vmatpush.bf16.msra.mxu0 %v2188
          %2387 = vmatpush.bf16.msra.mxu0 %v2180
          %2388 = vmatmul.bf16.gmra.mxu0 %v1899
          %v2389 = vpop.f32.mrf.mxu0
          %v2390 = vadd.f32 %v1972, %v2389
          %v2391 = vpop.f32.mrf.mxu0
          %2392 = vdwg.mxu0
          %2393 = vmatpush.bf16.msra.mxu0 %v2237
          %2394 = vmatpush.bf16.msra.mxu0 %v2229
          %2395 = vmatpush.bf16.msra.mxu0 %v2221
          %2396 = vmatpush.bf16.msra.mxu0 %v2213
          %2397 = vmatpush.bf16.msra.mxu0 %v2205
          %2398 = vmatpush.bf16.msra.mxu0 %v2197
          %2399 = vmatpush.bf16.msra.mxu0 %v2189
          %2400 = vmatpush.bf16.msra.mxu0 %v2181
          %2401 = vmatmul.bf16.gmra.mxu0 %v1899
          %v2402 = vpop.f32.mrf.mxu0
          %v2403 = vadd.f32 %v1973, %v2402
          %v2404 = vpop.f32.mrf.mxu0
          %2405 = vdwg.mxu0
          %v2406 = vsub.f32 0.0, %v2312
          %v2407 = vsub.f32 0.0, %v2325
          %v2408 = vsub.f32 0.0, %v2338
          %v2409 = vsub.f32 0.0, %v2351
          %v2410 = vsub.f32 0.0, %v2364
          %v2411 = vsub.f32 0.0, %v2377
          %v2412 = vsub.f32 0.0, %v2390
          %v2413 = vsub.f32 0.0, %v2403
          %v2414 = vmul.f32 %v2406, 1.442695
          %v2415 = vpow.pop %v2414
          %v2416 = vmul.f32 %v2407, 1.442695
          %v2417 = vpow.pop %v2416
          %v2418 = vmul.f32 %v2408, 1.442695
          %v2419 = vpow.pop %v2418
          %v2420 = vmul.f32 %v2409, 1.442695
          %v2421 = vpow.pop %v2420
          %v2422 = vmul.f32 %v2410, 1.442695
          %v2423 = vpow.pop %v2422
          %v2424 = vmul.f32 %v2411, 1.442695
          %v2425 = vpow.pop %v2424
          %v2426 = vmul.f32 %v2412, 1.442695
          %v2427 = vpow.pop %v2426
          %v2428 = vmul.f32 %v2413, 1.442695
          %v2429 = vpow.pop %v2428
          %v2430 = vadd.f32 %v2415, 1.0
          %v2431 = vadd.f32 %v2417, 1.0
          %v2432 = vadd.f32 %v2419, 1.0
          %v2433 = vadd.f32 %v2421, 1.0
          %v2434 = vadd.f32 %v2423, 1.0
          %v2435 = vadd.f32 %v2425, 1.0
          %v2436 = vadd.f32 %v2427, 1.0
          %v2437 = vadd.f32 %v2429, 1.0
          %v2438 = vrcp.pop %v2430
          %v2439 = vrcp.pop %v2431
          %v2440 = vrcp.pop %v2432
          %v2441 = vrcp.pop %v2433
          %v2442 = vrcp.pop %v2434
          %v2443 = vrcp.pop %v2435
          %v2444 = vrcp.pop %v2436
          %v2445 = vrcp.pop %v2437
          %v2446 = vmul.f32 %v2312, %v2438
          %v2447 = vmul.f32 %v2325, %v2439
          %v2448 = vmul.f32 %v2338, %v2440
          %v2449 = vmul.f32 %v2351, %v2441
          %v2450 = vmul.f32 %v2364, %v2442
          %v2451 = vmul.f32 %v2377, %v2443
          %v2452 = vmul.f32 %v2390, %v2444
          %v2453 = vmul.f32 %v2403, %v2445
          %v2454 = vld [vmem:[#allocation2] sm:$0xff]
          %v2455 = vpack.c.bf16 %v2446, %v2446
          %v2456 = vpack.c.bf16 %v2447, %v2447
          %v2457 = vpack.c.bf16 %v2448, %v2448
          %v2458 = vpack.c.bf16 %v2449, %v2449
          %v2459 = vpack.c.bf16 %v2450, %v2450
          %v2460 = vpack.c.bf16 %v2451, %v2451
          %v2461 = vpack.c.bf16 %v2452, %v2452
          %v2462 = vpack.c.bf16 %v2453, %v2453
          %v2463 = vld [vmem:[%s639] sm:$0xf]
          %v2464 = vld [vmem:[%s639 + $0x4] sm:$0xf]
          %v2465 = vld [vmem:[%s639 + $0x8] sm:$0xf]
          %v2466 = vld [vmem:[%s639 + $0xc] sm:$0xf]
          %v2467 = vld [vmem:[%s639 + $0x10] sm:$0xf]
          %v2468 = vld [vmem:[%s639 + $0x14] sm:$0xf]
          %v2469 = vld [vmem:[%s639 + $0x18] sm:$0xf]
          %v2470 = vld [vmem:[%s639 + $0x1c] sm:$0xf]
          %v2471 = vld [vmem:[%s639 + $0x20] sm:$0xf]
          %v2472 = vld [vmem:[%s639 + $0x24] sm:$0xf]
          %v2473 = vld [vmem:[%s639 + $0x28] sm:$0xf]
          %v2474 = vld [vmem:[%s639 + $0x2c] sm:$0xf]
          %v2475 = vld [vmem:[%s639 + $0x30] sm:$0xf]
          %v2476 = vld [vmem:[%s639 + $0x34] sm:$0xf]
          %v2477 = vld [vmem:[%s639 + $0x38] sm:$0xf]
          %v2478 = vld [vmem:[%s639 + $0x3c] sm:$0xf]
          %v2479 = vld [vmem:[%s639 + $0x40] sm:$0xf]
          %v2480 = vld [vmem:[%s639 + $0x44] sm:$0xf]
          %v2481 = vld [vmem:[%s639 + $0x48] sm:$0xf]
          %v2482 = vld [vmem:[%s639 + $0x4c] sm:$0xf]
          %v2483 = vld [vmem:[%s639 + $0x50] sm:$0xf]
          %v2484 = vld [vmem:[%s639 + $0x54] sm:$0xf]
          %v2485 = vld [vmem:[%s639 + $0x58] sm:$0xf]
          %v2486 = vld [vmem:[%s639 + $0x5c] sm:$0xf]
          %v2487 = vld [vmem:[%s639 + $0x60] sm:$0xf]
          %v2488 = vld [vmem:[%s639 + $0x64] sm:$0xf]
          %v2489 = vld [vmem:[%s639 + $0x68] sm:$0xf]
          %v2490 = vld [vmem:[%s639 + $0x6c] sm:$0xf]
          %v2491 = vld [vmem:[%s639 + $0x70] sm:$0xf]
          %v2492 = vld [vmem:[%s639 + $0x74] sm:$0xf]
          %v2493 = vld [vmem:[%s639 + $0x78] sm:$0xf]
          %v2494 = vld [vmem:[%s639 + $0x7c] sm:$0xf]
          %v2495 = vld [vmem:[%s639 + $0x80] sm:$0xf]
          %v2496 = vld [vmem:[%s639 + $0x84] sm:$0xf]
          %v2497 = vld [vmem:[%s639 + $0x88] sm:$0xf]
          %v2498 = vld [vmem:[%s639 + $0x8c] sm:$0xf]
          %v2499 = vld [vmem:[%s639 + $0x90] sm:$0xf]
          %v2500 = vld [vmem:[%s639 + $0x94] sm:$0xf]
          %v2501 = vld [vmem:[%s639 + $0x98] sm:$0xf]
          %v2502 = vld [vmem:[%s639 + $0x9c] sm:$0xf]
          %v2503 = vld [vmem:[%s639 + $0xa0] sm:$0xf]
          %v2504 = vld [vmem:[%s639 + $0xa4] sm:$0xf]
          %v2505 = vld [vmem:[%s639 + $0xa8] sm:$0xf]
          %v2506 = vld [vmem:[%s639 + $0xac] sm:$0xf]
          %v2507 = vld [vmem:[%s639 + $0xb0] sm:$0xf]
          %v2508 = vld [vmem:[%s639 + $0xb4] sm:$0xf]
          %v2509 = vld [vmem:[%s639 + $0xb8] sm:$0xf]
          %v2510 = vld [vmem:[%s639 + $0xbc] sm:$0xf]
          %v2511 = vld [vmem:[%s639 + $0xc0] sm:$0xf]
          %v2512 = vld [vmem:[%s639 + $0xc4] sm:$0xf]
          %v2513 = vld [vmem:[%s639 + $0xc8] sm:$0xf]
          %v2514 = vld [vmem:[%s639 + $0xcc] sm:$0xf]
          %v2515 = vld [vmem:[%s639 + $0xd0] sm:$0xf]
          %v2516 = vld [vmem:[%s639 + $0xd4] sm:$0xf]
          %v2517 = vld [vmem:[%s639 + $0xd8] sm:$0xf]
          %v2518 = vld [vmem:[%s639 + $0xdc] sm:$0xf]
          %v2519 = vld [vmem:[%s639 + $0xe0] sm:$0xf]
          %v2520 = vld [vmem:[%s639 + $0xe4] sm:$0xf]
          %v2521 = vld [vmem:[%s639 + $0xe8] sm:$0xf]
          %v2522 = vld [vmem:[%s639 + $0xec] sm:$0xf]
          %v2523 = vld [vmem:[%s639 + $0xf0] sm:$0xf]
          %v2524 = vld [vmem:[%s639 + $0xf4] sm:$0xf]
          %v2525 = vld [vmem:[%s639 + $0xf8] sm:$0xf]
          %v2526 = vld [vmem:[%s639 + $0xfc] sm:$0xf]
          %v2527 = vld [vmem:[%s639 + $0x100] sm:$0xf]
          %v2528 = vld [vmem:[%s639 + $0x104] sm:$0xf]
          %v2529 = vld [vmem:[%s639 + $0x108] sm:$0xf]
          %v2530 = vld [vmem:[%s639 + $0x10c] sm:$0xf]
          %v2531 = vld [vmem:[%s639 + $0x110] sm:$0xf]
          %v2532 = vld [vmem:[%s639 + $0x114] sm:$0xf]
          %v2533 = vld [vmem:[%s639 + $0x118] sm:$0xf]
          %v2534 = vld [vmem:[%s639 + $0x11c] sm:$0xf]
          %v2535 = vld [vmem:[%s639 + $0x120] sm:$0xf]
          %v2536 = vld [vmem:[%s639 + $0x124] sm:$0xf]
          %v2537 = vld [vmem:[%s639 + $0x128] sm:$0xf]
          %v2538 = vld [vmem:[%s639 + $0x12c] sm:$0xf]
          %v2539 = vld [vmem:[%s639 + $0x130] sm:$0xf]
          %v2540 = vld [vmem:[%s639 + $0x134] sm:$0xf]
          %v2541 = vld [vmem:[%s639 + $0x138] sm:$0xf]
          %v2542 = vld [vmem:[%s639 + $0x13c] sm:$0xf]
          %v2543 = vld [vmem:[%s639 + $0x140] sm:$0xf]
          %v2544 = vld [vmem:[%s639 + $0x144] sm:$0xf]
          %v2545 = vld [vmem:[%s639 + $0x148] sm:$0xf]
          %v2546 = vld [vmem:[%s639 + $0x14c] sm:$0xf]
          %v2547 = vld [vmem:[%s639 + $0x150] sm:$0xf]
          %v2548 = vld [vmem:[%s639 + $0x154] sm:$0xf]
          %v2549 = vld [vmem:[%s639 + $0x158] sm:$0xf]
          %v2550 = vld [vmem:[%s639 + $0x15c] sm:$0xf]
          %v2551 = vld [vmem:[%s639 + $0x160] sm:$0xf]
          %v2552 = vld [vmem:[%s639 + $0x164] sm:$0xf]
          %v2553 = vld [vmem:[%s639 + $0x168] sm:$0xf]
          %v2554 = vld [vmem:[%s639 + $0x16c] sm:$0xf]
          %v2555 = vld [vmem:[%s639 + $0x170] sm:$0xf]
          %v2556 = vld [vmem:[%s639 + $0x174] sm:$0xf]
          %v2557 = vld [vmem:[%s639 + $0x178] sm:$0xf]
          %v2558 = vld [vmem:[%s639 + $0x17c] sm:$0xf]
          %v2559 = vld [vmem:[%s639 + $0x180] sm:$0xf]
          %v2560 = vld [vmem:[%s639 + $0x184] sm:$0xf]
          %v2561 = vld [vmem:[%s639 + $0x188] sm:$0xf]
          %v2562 = vld [vmem:[%s639 + $0x18c] sm:$0xf]
          %v2563 = vld [vmem:[%s639 + $0x190] sm:$0xf]
          %v2564 = vld [vmem:[%s639 + $0x194] sm:$0xf]
          %v2565 = vld [vmem:[%s639 + $0x198] sm:$0xf]
          %v2566 = vld [vmem:[%s639 + $0x19c] sm:$0xf]
          %v2567 = vld [vmem:[%s639 + $0x1a0] sm:$0xf]
          %v2568 = vld [vmem:[%s639 + $0x1a4] sm:$0xf]
          %v2569 = vld [vmem:[%s639 + $0x1a8] sm:$0xf]
          %v2570 = vld [vmem:[%s639 + $0x1ac] sm:$0xf]
          %v2571 = vld [vmem:[%s639 + $0x1b0] sm:$0xf]
          %v2572 = vld [vmem:[%s639 + $0x1b4] sm:$0xf]
          %v2573 = vld [vmem:[%s639 + $0x1b8] sm:$0xf]
          %v2574 = vld [vmem:[%s639 + $0x1bc] sm:$0xf]
          %v2575 = vld [vmem:[%s639 + $0x1c0] sm:$0xf]
          %v2576 = vld [vmem:[%s639 + $0x1c4] sm:$0xf]
          %v2577 = vld [vmem:[%s639 + $0x1c8] sm:$0xf]
          %v2578 = vld [vmem:[%s639 + $0x1cc] sm:$0xf]
          %v2579 = vld [vmem:[%s639 + $0x1d0] sm:$0xf]
          %v2580 = vld [vmem:[%s639 + $0x1d4] sm:$0xf]
          %v2581 = vld [vmem:[%s639 + $0x1d8] sm:$0xf]
          %v2582 = vld [vmem:[%s639 + $0x1dc] sm:$0xf]
          %v2583 = vld [vmem:[%s639 + $0x1e0] sm:$0xf]
          %v2584 = vld [vmem:[%s639 + $0x1e4] sm:$0xf]
          %v2585 = vld [vmem:[%s639 + $0x1e8] sm:$0xf]
          %v2586 = vld [vmem:[%s639 + $0x1ec] sm:$0xf]
          %v2587 = vld [vmem:[%s639 + $0x1f0] sm:$0xf]
          %v2588 = vld [vmem:[%s639 + $0x1f4] sm:$0xf]
          %v2589 = vld [vmem:[%s639 + $0x1f8] sm:$0xf]
          %v2590 = vld [vmem:[%s639 + $0x1fc] sm:$0xf]
          %v2719 = vunpack.c.l.b16 %v2463
          %v2720 = vunpack.c.l.b16 %v2464
          %v2721 = vunpack.c.l.b16 %v2465
          %v2722 = vunpack.c.l.b16 %v2466
          %v2723 = vunpack.c.l.b16 %v2467
          %v2724 = vunpack.c.l.b16 %v2468
          %v2725 = vunpack.c.l.b16 %v2469
          %v2726 = vunpack.c.l.b16 %v2470
          %v2727 = vunpack.c.l.b16 %v2471
          %v2728 = vunpack.c.l.b16 %v2472
          %v2729 = vunpack.c.l.b16 %v2473
          %v2730 = vunpack.c.l.b16 %v2474
          %v2731 = vunpack.c.l.b16 %v2475
          %v2732 = vunpack.c.l.b16 %v2476
          %v2733 = vunpack.c.l.b16 %v2477
          %v2734 = vunpack.c.l.b16 %v2478
          %v2735 = vunpack.c.l.b16 %v2479
          %v2736 = vunpack.c.l.b16 %v2480
          %v2737 = vunpack.c.l.b16 %v2481
          %v2738 = vunpack.c.l.b16 %v2482
          %v2739 = vunpack.c.l.b16 %v2483
          %v2740 = vunpack.c.l.b16 %v2484
          %v2741 = vunpack.c.l.b16 %v2485
          %v2742 = vunpack.c.l.b16 %v2486
          %v2743 = vunpack.c.l.b16 %v2487
          %v2744 = vunpack.c.l.b16 %v2488
          %v2745 = vunpack.c.l.b16 %v2489
          %v2746 = vunpack.c.l.b16 %v2490
          %v2747 = vunpack.c.l.b16 %v2491
          %v2748 = vunpack.c.l.b16 %v2492
          %v2749 = vunpack.c.l.b16 %v2493
          %v2750 = vunpack.c.l.b16 %v2494
          %v2751 = vunpack.c.l.b16 %v2495
          %v2752 = vunpack.c.l.b16 %v2496
          %v2753 = vunpack.c.l.b16 %v2497
          %v2754 = vunpack.c.l.b16 %v2498
          %v2755 = vunpack.c.l.b16 %v2499
          %v2756 = vunpack.c.l.b16 %v2500
          %v2757 = vunpack.c.l.b16 %v2501
          %v2758 = vunpack.c.l.b16 %v2502
          %v2759 = vunpack.c.l.b16 %v2503
          %v2760 = vunpack.c.l.b16 %v2504
          %v2761 = vunpack.c.l.b16 %v2505
          %v2762 = vunpack.c.l.b16 %v2506
          %v2763 = vunpack.c.l.b16 %v2507
          %v2764 = vunpack.c.l.b16 %v2508
          %v2765 = vunpack.c.l.b16 %v2509
          %v2766 = vunpack.c.l.b16 %v2510
          %v2767 = vunpack.c.l.b16 %v2511
          %v2768 = vunpack.c.l.b16 %v2512
          %v2769 = vunpack.c.l.b16 %v2513
          %v2770 = vunpack.c.l.b16 %v2514
          %v2771 = vunpack.c.l.b16 %v2515
          %v2772 = vunpack.c.l.b16 %v2516
          %v2773 = vunpack.c.l.b16 %v2517
          %v2774 = vunpack.c.l.b16 %v2518
          %v2775 = vunpack.c.l.b16 %v2519
          %v2776 = vunpack.c.l.b16 %v2520
          %v2777 = vunpack.c.l.b16 %v2521
          %v2778 = vunpack.c.l.b16 %v2522
          %v2779 = vunpack.c.l.b16 %v2523
          %v2780 = vunpack.c.l.b16 %v2524
          %v2781 = vunpack.c.l.b16 %v2525
          %v2782 = vunpack.c.l.b16 %v2526
          %v2783 = vunpack.c.l.b16 %v2527
          %v2784 = vunpack.c.l.b16 %v2528
          %v2785 = vunpack.c.l.b16 %v2529
          %v2786 = vunpack.c.l.b16 %v2530
          %v2787 = vunpack.c.l.b16 %v2531
          %v2788 = vunpack.c.l.b16 %v2532
          %v2789 = vunpack.c.l.b16 %v2533
          %v2790 = vunpack.c.l.b16 %v2534
          %v2791 = vunpack.c.l.b16 %v2535
          %v2792 = vunpack.c.l.b16 %v2536
          %v2793 = vunpack.c.l.b16 %v2537
          %v2794 = vunpack.c.l.b16 %v2538
          %v2795 = vunpack.c.l.b16 %v2539
          %v2796 = vunpack.c.l.b16 %v2540
          %v2797 = vunpack.c.l.b16 %v2541
          %v2798 = vunpack.c.l.b16 %v2542
          %v2799 = vunpack.c.l.b16 %v2543
          %v2800 = vunpack.c.l.b16 %v2544
          %v2801 = vunpack.c.l.b16 %v2545
          %v2802 = vunpack.c.l.b16 %v2546
          %v2803 = vunpack.c.l.b16 %v2547
          %v2804 = vunpack.c.l.b16 %v2548
          %v2805 = vunpack.c.l.b16 %v2549
          %v2806 = vunpack.c.l.b16 %v2550
          %v2807 = vunpack.c.l.b16 %v2551
          %v2808 = vunpack.c.l.b16 %v2552
          %v2809 = vunpack.c.l.b16 %v2553
          %v2810 = vunpack.c.l.b16 %v2554
          %v2811 = vunpack.c.l.b16 %v2555
          %v2812 = vunpack.c.l.b16 %v2556
          %v2813 = vunpack.c.l.b16 %v2557
          %v2814 = vunpack.c.l.b16 %v2558
          %v2815 = vunpack.c.l.b16 %v2559
          %v2816 = vunpack.c.l.b16 %v2560
          %v2817 = vunpack.c.l.b16 %v2561
          %v2818 = vunpack.c.l.b16 %v2562
          %v2819 = vunpack.c.l.b16 %v2563
          %v2820 = vunpack.c.l.b16 %v2564
          %v2821 = vunpack.c.l.b16 %v2565
          %v2822 = vunpack.c.l.b16 %v2566
          %v2823 = vunpack.c.l.b16 %v2567
          %v2824 = vunpack.c.l.b16 %v2568
          %v2825 = vunpack.c.l.b16 %v2569
          %v2826 = vunpack.c.l.b16 %v2570
          %v2827 = vunpack.c.l.b16 %v2571
          %v2828 = vunpack.c.l.b16 %v2572
          %v2829 = vunpack.c.l.b16 %v2573
          %v2830 = vunpack.c.l.b16 %v2574
          %v2831 = vunpack.c.l.b16 %v2575
          %v2832 = vunpack.c.l.b16 %v2576
          %v2833 = vunpack.c.l.b16 %v2577
          %v2834 = vunpack.c.l.b16 %v2578
          %v2835 = vunpack.c.l.b16 %v2579
          %v2836 = vunpack.c.l.b16 %v2580
          %v2837 = vunpack.c.l.b16 %v2581
          %v2838 = vunpack.c.l.b16 %v2582
          %v2839 = vunpack.c.l.b16 %v2583
          %v2840 = vunpack.c.l.b16 %v2584
          %v2841 = vunpack.c.l.b16 %v2585
          %v2842 = vunpack.c.l.b16 %v2586
          %v2843 = vunpack.c.l.b16 %v2587
          %v2844 = vunpack.c.l.b16 %v2588
          %v2845 = vunpack.c.l.b16 %v2589
          %v2846 = vunpack.c.l.b16 %v2590
          %v2847 = vpack.c.b16 %v2720, %v2719
          %v2848 = vpack.c.b16 %v2722, %v2721
          %v2849 = vpack.c.b16 %v2724, %v2723
          %v2850 = vpack.c.b16 %v2726, %v2725
          %v2851 = vpack.c.b16 %v2728, %v2727
          %v2852 = vpack.c.b16 %v2730, %v2729
          %v2853 = vpack.c.b16 %v2732, %v2731
          %v2854 = vpack.c.b16 %v2734, %v2733
          %v2855 = vpack.c.b16 %v2736, %v2735
          %v2856 = vpack.c.b16 %v2738, %v2737
          %v2857 = vpack.c.b16 %v2740, %v2739
          %v2858 = vpack.c.b16 %v2742, %v2741
          %v2859 = vpack.c.b16 %v2744, %v2743
          %v2860 = vpack.c.b16 %v2746, %v2745
          %v2861 = vpack.c.b16 %v2748, %v2747
          %v2862 = vpack.c.b16 %v2750, %v2749
          %v2863 = vpack.c.b16 %v2752, %v2751
          %v2864 = vpack.c.b16 %v2754, %v2753
          %v2865 = vpack.c.b16 %v2756, %v2755
          %v2866 = vpack.c.b16 %v2758, %v2757
          %v2867 = vpack.c.b16 %v2760, %v2759
          %v2868 = vpack.c.b16 %v2762, %v2761
          %v2869 = vpack.c.b16 %v2764, %v2763
          %v2870 = vpack.c.b16 %v2766, %v2765
          %v2871 = vpack.c.b16 %v2768, %v2767
          %v2872 = vpack.c.b16 %v2770, %v2769
          %v2873 = vpack.c.b16 %v2772, %v2771
          %v2874 = vpack.c.b16 %v2774, %v2773
          %v2875 = vpack.c.b16 %v2776, %v2775
          %v2876 = vpack.c.b16 %v2778, %v2777
          %v2877 = vpack.c.b16 %v2780, %v2779
          %v2878 = vpack.c.b16 %v2782, %v2781
          %v2879 = vpack.c.b16 %v2784, %v2783
          %v2880 = vpack.c.b16 %v2786, %v2785
          %v2881 = vpack.c.b16 %v2788, %v2787
          %v2882 = vpack.c.b16 %v2790, %v2789
          %v2883 = vpack.c.b16 %v2792, %v2791
          %v2884 = vpack.c.b16 %v2794, %v2793
          %v2885 = vpack.c.b16 %v2796, %v2795
          %v2886 = vpack.c.b16 %v2798, %v2797
          %v2887 = vpack.c.b16 %v2800, %v2799
          %v2888 = vpack.c.b16 %v2802, %v2801
          %v2889 = vpack.c.b16 %v2804, %v2803
          %v2890 = vpack.c.b16 %v2806, %v2805
          %v2891 = vpack.c.b16 %v2808, %v2807
          %v2892 = vpack.c.b16 %v2810, %v2809
          %v2893 = vpack.c.b16 %v2812, %v2811
          %v2894 = vpack.c.b16 %v2814, %v2813
          %v2895 = vpack.c.b16 %v2816, %v2815
          %v2896 = vpack.c.b16 %v2818, %v2817
          %v2897 = vpack.c.b16 %v2820, %v2819
          %v2898 = vpack.c.b16 %v2822, %v2821
          %v2899 = vpack.c.b16 %v2824, %v2823
          %v2900 = vpack.c.b16 %v2826, %v2825
          %v2901 = vpack.c.b16 %v2828, %v2827
          %v2902 = vpack.c.b16 %v2830, %v2829
          %v2903 = vpack.c.b16 %v2832, %v2831
          %v2904 = vpack.c.b16 %v2834, %v2833
          %v2905 = vpack.c.b16 %v2836, %v2835
          %v2906 = vpack.c.b16 %v2838, %v2837
          %v2907 = vpack.c.b16 %v2840, %v2839
          %v2908 = vpack.c.b16 %v2842, %v2841
          %v2909 = vpack.c.b16 %v2844, %v2843
          %v2910 = vpack.c.b16 %v2846, %v2845
          %2975 = vmatpush.bf16.msra.mxu0 %v2854
          %2976 = vmatpush.bf16.msra.mxu0 %v2853
          %2977 = vmatpush.bf16.msra.mxu0 %v2852
          %2978 = vmatpush.bf16.msra.mxu0 %v2851
          %2979 = vmatpush.bf16.msra.mxu0 %v2850
          %2980 = vmatpush.bf16.msra.mxu0 %v2849
          %2981 = vmatpush.bf16.msra.mxu0 %v2848
          %2982 = vmatpush.bf16.msra.mxu0 %v2847
          %2983 = vmatmul.bf16.gmra.mxu0 %v2455
          %v2984 = vpop.f32.mrf.mxu0
          %v2985 = vadd.f32 0.0, %v2984
          %v2986 = vpop.f32.mrf.mxu0
          %2987 = vdwg.mxu0
          %2988 = vmatpush.bf16.msra.mxu0 %v2862
          %2989 = vmatpush.bf16.msra.mxu0 %v2861
          %2990 = vmatpush.bf16.msra.mxu0 %v2860
          %2991 = vmatpush.bf16.msra.mxu0 %v2859
          %2992 = vmatpush.bf16.msra.mxu0 %v2858
          %2993 = vmatpush.bf16.msra.mxu0 %v2857
          %2994 = vmatpush.bf16.msra.mxu0 %v2856
          %2995 = vmatpush.bf16.msra.mxu0 %v2855
          %2996 = vmatmul.bf16.gmra.mxu0 %v2456
          %v2997 = vpop.f32.mrf.mxu0
          %v2998 = vadd.f32 %v2985, %v2997
          %v2999 = vpop.f32.mrf.mxu0
          %3000 = vdwg.mxu0
          %3001 = vmatpush.bf16.msra.mxu0 %v2870
          %3002 = vmatpush.bf16.msra.mxu0 %v2869
          %3003 = vmatpush.bf16.msra.mxu0 %v2868
          %3004 = vmatpush.bf16.msra.mxu0 %v2867
          %3005 = vmatpush.bf16.msra.mxu0 %v2866
          %3006 = vmatpush.bf16.msra.mxu0 %v2865
          %3007 = vmatpush.bf16.msra.mxu0 %v2864
          %3008 = vmatpush.bf16.msra.mxu0 %v2863
          %3009 = vmatmul.bf16.gmra.mxu0 %v2457
          %v3010 = vpop.f32.mrf.mxu0
          %v3011 = vadd.f32 %v2998, %v3010
          %v3012 = vpop.f32.mrf.mxu0
          %3013 = vdwg.mxu0
          %3014 = vmatpush.bf16.msra.mxu0 %v2878
          %3015 = vmatpush.bf16.msra.mxu0 %v2877
          %3016 = vmatpush.bf16.msra.mxu0 %v2876
          %3017 = vmatpush.bf16.msra.mxu0 %v2875
          %3018 = vmatpush.bf16.msra.mxu0 %v2874
          %3019 = vmatpush.bf16.msra.mxu0 %v2873
          %3020 = vmatpush.bf16.msra.mxu0 %v2872
          %3021 = vmatpush.bf16.msra.mxu0 %v2871
          %3022 = vmatmul.bf16.gmra.mxu0 %v2458
          %v3023 = vpop.f32.mrf.mxu0
          %v3024 = vadd.f32 %v3011, %v3023
          %v3025 = vpop.f32.mrf.mxu0
          %3026 = vdwg.mxu0
          %3027 = vmatpush.bf16.msra.mxu0 %v2886
          %3028 = vmatpush.bf16.msra.mxu0 %v2885
          %3029 = vmatpush.bf16.msra.mxu0 %v2884
          %3030 = vmatpush.bf16.msra.mxu0 %v2883
          %3031 = vmatpush.bf16.msra.mxu0 %v2882
          %3032 = vmatpush.bf16.msra.mxu0 %v2881
          %3033 = vmatpush.bf16.msra.mxu0 %v2880
          %3034 = vmatpush.bf16.msra.mxu0 %v2879
          %3035 = vmatmul.bf16.gmra.mxu0 %v2459
          %v3036 = vpop.f32.mrf.mxu0
          %v3037 = vadd.f32 %v3024, %v3036
          %v3038 = vpop.f32.mrf.mxu0
          %3039 = vdwg.mxu0
          %3040 = vmatpush.bf16.msra.mxu0 %v2894
          %3041 = vmatpush.bf16.msra.mxu0 %v2893
          %3042 = vmatpush.bf16.msra.mxu0 %v2892
          %3043 = vmatpush.bf16.msra.mxu0 %v2891
          %3044 = vmatpush.bf16.msra.mxu0 %v2890
          %3045 = vmatpush.bf16.msra.mxu0 %v2889
          %3046 = vmatpush.bf16.msra.mxu0 %v2888
          %3047 = vmatpush.bf16.msra.mxu0 %v2887
          %3048 = vmatmul.bf16.gmra.mxu0 %v2460
          %v3049 = vpop.f32.mrf.mxu0
          %v3050 = vadd.f32 %v3037, %v3049
          %v3051 = vpop.f32.mrf.mxu0
          %3052 = vdwg.mxu0
          %3053 = vmatpush.bf16.msra.mxu0 %v2902
          %3054 = vmatpush.bf16.msra.mxu0 %v2901
          %3055 = vmatpush.bf16.msra.mxu0 %v2900
          %3056 = vmatpush.bf16.msra.mxu0 %v2899
          %3057 = vmatpush.bf16.msra.mxu0 %v2898
          %3058 = vmatpush.bf16.msra.mxu0 %v2897
          %3059 = vmatpush.bf16.msra.mxu0 %v2896
          %3060 = vmatpush.bf16.msra.mxu0 %v2895
          %3061 = vmatmul.bf16.gmra.mxu0 %v2461
          %v3062 = vpop.f32.mrf.mxu0
          %v3063 = vadd.f32 %v3050, %v3062
          %v3064 = vpop.f32.mrf.mxu0
          %3065 = vdwg.mxu0
          %3066 = vmatpush.bf16.msra.mxu0 %v2910
          %3067 = vmatpush.bf16.msra.mxu0 %v2909
          %3068 = vmatpush.bf16.msra.mxu0 %v2908
          %3069 = vmatpush.bf16.msra.mxu0 %v2907
          %3070 = vmatpush.bf16.msra.mxu0 %v2906
          %3071 = vmatpush.bf16.msra.mxu0 %v2905
          %3072 = vmatpush.bf16.msra.mxu0 %v2904
          %3073 = vmatpush.bf16.msra.mxu0 %v2903
          %3074 = vmatmul.bf16.gmra.mxu0 %v2462
          %v3075 = vpop.f32.mrf.mxu0
          %v3076 = vadd.f32 %v3063, %v3075
          %v3077 = vpop.f32.mrf.mxu0
          %3078 = vdwg.mxu0
          %v3079 = vadd.f32 %v2454, %v3076
          %3080 = vst [vmem:[#allocation2] sm:$0xff] %v3079
        $region112: #{network_forward.1} parent=71 // pred_fallthru
          _
        %p3081 = pnand %p1894, %p1876
        %p3082 = pneg %p3081
        // Predicated region
        $region113: #{network_forward.1} parent=71 // pred_check
          _
        $region114: #{network_forward.1} parent=71 // pred_check_branch
          %3084 = sbr.rel (%p3081) target = $region116
        $region115: #{network_forward.1} parent=71 // pred_region
          %v3085 = vld [vmem:[#allocation2] sm:$0xff]
          %v3086 = vld [vmem:[%s8] sm:$0x1]
          %v3088 = vperm.slane %v3086, 0
          %v3090 = vadd.f32 %v3085, %v3088
          %v3091 = vsub.f32 0.0, %v3090
          %v3092 = vmul.f32 %v3091, 1.442695
          %v3093 = vpow.pop %v3092
          %v3094 = vadd.f32 %v3093, 1.0
          %v3095 = vrcp.pop %v3094
          %v3096 = vmul.f32 %v3090, %v3095
          %v3097 = vld [vmem:[%s9] sm:$0xff]
          %v3098 = vld [vmem:[%s9 + $0x8] sm:$0xff]
          %v3099 = vld [vmem:[%s9 + $0x10] sm:$0xff]
          %v3100 = vld [vmem:[%s9 + $0x18] sm:$0xff]
          %v3101 = vld [vmem:[%s9 + $0x20] sm:$0xff]
          %v3102 = vld [vmem:[%s9 + $0x28] sm:$0xff]
          %v3103 = vld [vmem:[%s9 + $0x30] sm:$0xff]
          %v3104 = vld [vmem:[%s9 + $0x38] sm:$0xff]
          %v3105 = vld [vmem:[%s9 + $0x40] sm:$0xff]
          %v3106 = vld [vmem:[%s9 + $0x48] sm:$0xff]
          %v3107 = vld [vmem:[%s9 + $0x50] sm:$0xff]
          %v3108 = vld [vmem:[%s9 + $0x58] sm:$0xff]
          %v3109 = vld [vmem:[%s9 + $0x60] sm:$0xff]
          %v3110 = vld [vmem:[%s9 + $0x68] sm:$0xff]
          %v3111 = vld [vmem:[%s9 + $0x70] sm:$0xff]
          %v3112 = vld [vmem:[%s9 + $0x78] sm:$0xff]
          %v3113 = vld [vmem:[%s10] sm:$0x1]
          %v3115 = vperm.slane %v3113, 0
          %3117 = vmatpush.msra.mxu0 %v3112
          %3118 = vmatpush.msra.mxu0 %v3111
          %3119 = vmatpush.msra.mxu0 %v3110
          %3120 = vmatpush.msra.mxu0 %v3109
          %3121 = vmatpush.msra.mxu0 %v3108
          %3122 = vmatpush.msra.mxu0 %v3107
          %3123 = vmatpush.msra.mxu0 %v3106
          %3124 = vmatpush.msra.mxu0 %v3105
          %3125 = vmatpush.msra.mxu0 %v3104
          %3126 = vmatpush.msra.mxu0 %v3103
          %3127 = vmatpush.msra.mxu0 %v3102
          %3128 = vmatpush.msra.mxu0 %v3101
          %3129 = vmatpush.msra.mxu0 %v3100
          %3130 = vmatpush.msra.mxu0 %v3099
          %3131 = vmatpush.msra.mxu0 %v3098
          %3132 = vmatpush.msra.mxu0 %v3097
          %3133 = vmatmul.f32.gmra.mxu0 %v3096
          %v3134 = vpop.f32.mrf.mxu0
          %v3135 = vadd.f32 %v3115, %v3134
          %3136 = vdwg.mxu0
          %v3137 = vsub.f32 0.0, %v3135
          %v3138 = vmul.f32 %v3137, 1.442695
          %v3139 = vpow.pop %v3138
          %v3140 = vadd.f32 %v3139, 1.0
          %v3141 = vrcp.pop %v3140
          %v3142 = vmul.f32 %v3135, %v3141
          %v3143 = vld [vmem:[%s11] sm:$0xff]
          %v3144 = vld [vmem:[%s11 + $0x8] sm:$0xff]
          %v3145 = vld [vmem:[%s11 + $0x10] sm:$0xff]
          %v3146 = vld [vmem:[%s11 + $0x18] sm:$0xff]
          %v3147 = vld [vmem:[%s11 + $0x20] sm:$0xff]
          %v3148 = vld [vmem:[%s11 + $0x28] sm:$0xff]
          %v3149 = vld [vmem:[%s11 + $0x30] sm:$0xff]
          %v3150 = vld [vmem:[%s11 + $0x38] sm:$0xff]
          %v3151 = vld [vmem:[%s11 + $0x40] sm:$0xff]
          %v3152 = vld [vmem:[%s11 + $0x48] sm:$0xff]
          %v3153 = vld [vmem:[%s11 + $0x50] sm:$0xff]
          %v3154 = vld [vmem:[%s11 + $0x58] sm:$0xff]
          %v3155 = vld [vmem:[%s11 + $0x60] sm:$0xff]
          %v3156 = vld [vmem:[%s11 + $0x68] sm:$0xff]
          %v3157 = vld [vmem:[%s11 + $0x70] sm:$0xff]
          %v3158 = vld [vmem:[%s11 + $0x78] sm:$0xff]
          %v3159 = vld [vmem:[%s12] sm:$0x1]
          %v3161 = vperm.slane %v3159, 0
          %3163 = vmatpush.msra.mxu0 %v3158
          %3164 = vmatpush.msra.mxu0 %v3157
          %3165 = vmatpush.msra.mxu0 %v3156
          %3166 = vmatpush.msra.mxu0 %v3155
          %3167 = vmatpush.msra.mxu0 %v3154
          %3168 = vmatpush.msra.mxu0 %v3153
          %3169 = vmatpush.msra.mxu0 %v3152
          %3170 = vmatpush.msra.mxu0 %v3151
          %3171 = vmatpush.msra.mxu0 %v3150
          %3172 = vmatpush.msra.mxu0 %v3149
          %3173 = vmatpush.msra.mxu0 %v3148
          %3174 = vmatpush.msra.mxu0 %v3147
          %3175 = vmatpush.msra.mxu0 %v3146
          %3176 = vmatpush.msra.mxu0 %v3145
          %3177 = vmatpush.msra.mxu0 %v3144
          %3178 = vmatpush.msra.mxu0 %v3143
          %3179 = vmatmul.f32.gmra.mxu0 %v3142
          %v3180 = vpop.f32.mrf.mxu0
          %v3181 = vadd.f32 %v3161, %v3180
          %3182 = vdwg.mxu0
          %vm3183 = vcmask 15360
          %3184 = vst.msk [vmem:[%s13] sm:$0xff] %vm3183, %v3181
        $region116: #{network_forward.1} parent=71 // pred_fallthru
          _
        // Predicated region
        $region117: #{network_forward.1} parent=71 // pred_check
          %p3185 = pneg %p394
        $region118: #{network_forward.1} parent=71 // pred_check_branch
          %3187 = sbr.rel (%p3185) target = $region120
        $region119: #{network_forward.1} parent=71 // pred_region
          _
        $region120: #{network_forward.1} parent=71 // pred_fallthru
          _
        // Predicated region
        $region121: #{network_forward.1} parent=71 // pred_check
          %p3188 = pneg %p394
        $region122: #{network_forward.1} parent=71 // pred_check_branch
          %3190 = sbr.rel (%p3188) target = $region124
        $region123: #{network_forward.1} parent=71 // pred_region
          _
        $region124: #{network_forward.1} parent=71 // pred_fallthru
          _
      $region72: #{network_forward.1} parent=5 // pred_fallthru
        _
      %p3191 = scmp.le.s32.totalorder 2, %s31
      // Predicated region
      $region125: #{network_forward.1} parent=5 // pred_check
        %p3192 = pneg %p3191
      $region126: #{network_forward.1} parent=5 // pred_check_branch
        %3194 = sbr.rel (%p3192) target = $region128
      $region127: #{network_forward.1} parent=5 // pred_region
        %s3195 = ssub.s32 %s31, 2
      $region128: #{network_forward.1} parent=5 // pred_fallthru
        _
    $region6: #{network_forward.1} parent=1 // loop_footer
      %s35 = sadd.s32 1, %s31
    $region7: #{network_forward.1} parent=1 // loop_footer_branch
      %30 = sbr.rel target = $region3
    $region8: #{network_forward.1} parent=1 // loop_exit
      _
    %3196 = vsyncpa [#allocation5], 1
    %s3197 = scalar_lea.sflag [#allocation5], 1
    %3198 = vsyncpa %s3197, 1
    %3199 = vsyncpa [#allocation7], 1
    %s3200 = scalar_lea.sflag [#allocation7], 1
    %3201 = vsyncpa %s3200, 1
    %3202 = vsyncpa [#allocation10], 1
    %s3203 = scalar_lea.sflag [#allocation10], 1
    %3204 = vsyncpa %s3203, 1
    %3205 = vsyncpa [#allocation13], 1
    %s3206 = scalar_lea.sflag [#allocation13], 1
    %3207 = vsyncpa %s3206, 1

</llo_original>
